<compile_context>
chip_gen: v7x
topology: tpu7x:2x2x1
jax: 0.10.0
libtpu: 0.0.40
codegen_flags: <defaults>
</compile_context>

<pallas_src>
import math
from functools import partial

import jax
import jax.numpy as jnp
from jax.experimental import pallas as pl
from jax.experimental.pallas import tpu as pltpu


# ----------------------------- shared helpers ------------------------------

def _layer_norm(x, w, b, eps=1e-5):
    mu = jnp.mean(x, axis=-1, keepdims=True)
    var = jnp.mean((x - mu) ** 2, axis=-1, keepdims=True)
    return (x - mu) * jax.lax.rsqrt(var + eps) * w + b


def _new_gelu(x):
    return 0.5 * x * (1.0 + jnp.tanh(
        math.sqrt(2.0 / math.pi) * (x + 0.044715 * (x ** 3))))


# ------------------------------- the kernel --------------------------------

def _make_kernel(num_heads, is_causal, b_tile, seq_len, emb_dim):
    H, S, D = num_heads, seq_len, emb_dim
    hd = D // H
    M = b_tile * S                       # merged (batch_tile * seq) rows
    scale = 1.0 / math.sqrt(hd)
    bf16 = jnp.bfloat16
    f32 = jnp.float32

    def kernel(x_ref, pos_ref,
               ln1_w_ref, ln1_b_ref, qkv_w_ref, qkv_b_ref,
               attnp_w_ref, attnp_b_ref,
               ln2_w_ref, ln2_b_ref, fc_w_ref, fc_b_ref,
               proj_w_ref, proj_b_ref, lnf_w_ref, lnf_b_ref,
               o_ref, h_ref):
        l = pl.program_id(1)                          # layer index (inner axis)

        # ---- prologue: residual stream = x (+ learned positional encoding) ----
        @pl.when(l == 0)
        def _():
            x = x_ref[...] + pos_ref[...][None, :, :]          # (Bt, S, D)
            h_ref[...] = x.reshape(M, D)                       # merge leading dims

        h = h_ref[...]                                          # (M, D) f32

        # --------------------------- self-attention -------------------------
        a = _layer_norm(h, ln1_w_ref[...], ln1_b_ref[...])      # f32
        # lane-dense QKV: single (M, D) @ (D, 3D) matmul, f32 accumulation
        qkv = jnp.dot(a.astype(bf16), qkv_w_ref[...],
                      preferred_element_type=f32) + qkv_b_ref[...]   # (M, 3D)

        if is_causal:
            row = jax.lax.broadcasted_iota(jnp.int32, (S, S), 0)
            col = jax.lax.broadcasted_iota(jnp.int32, (S, S), 1)
            neg = jnp.where(col <= row, 0.0, -1e30).astype(f32)[None]  # (1,S,S)

        head_outs = []
        for hh in range(H):                                   # static unroll
            q_h = qkv[:, hh * hd:(hh + 1) * hd].reshape(b_tile, S, hd)
            k_h = qkv[:, D + hh * hd:D + (hh + 1) * hd].reshape(b_tile, S, hd)
            v_h = qkv[:, 2 * D + hh * hd:2 * D + (hh + 1) * hd].reshape(b_tile, S, hd)

            s = jnp.einsum('bqd,bkd->bqk',
                           q_h.astype(bf16), k_h.astype(bf16),
                           preferred_element_type=f32) * scale       # (Bt,S,S) f32
            if is_causal:
                s = s + neg                       # mask on f32 scores (keep!)
            s = s - jnp.max(s, axis=-1, keepdims=True)
            p = jnp.exp(s)
            p = p / jnp.sum(p, axis=-1, keepdims=True)                # exact divide

            y_h = jnp.einsum('bqk,bkd->bqd',
                             p.astype(bf16), v_h.astype(bf16),
                             preferred_element_type=f32)              # (Bt,S,hd)
            head_outs.append(y_h.reshape(M, hd))

        # head merge folded into the output projection: lane-concat (head-major,
        # matching the c_proj weight layout) then one (M,D)@(D,D) matmul so the
        # sum over heads happens in the MXU f32 accumulator.
        y = jnp.concatenate(head_outs, axis=-1)                        # (M, D)
        y = jnp.dot(y.astype(bf16), attnp_w_ref[...],
                    preferred_element_type=f32) + attnp_b_ref[...]
        h = h + y

        # -------------------------------- MLP --------------------------------
        m = _layer_norm(h, ln2_w_ref[...], ln2_b_ref[...])
        m = jnp.dot(m.astype(bf16), fc_w_ref[...],
                    preferred_element_type=f32) + fc_b_ref[...]
        m = _new_gelu(m)
        m = jnp.dot(m.astype(bf16), proj_w_ref[...],
                    preferred_element_type=f32) + proj_b_ref[...]
        h = h + m

        h_ref[...] = h                               # carry residual to next layer

        # ---- epilogue: final LayerNorm ----
        @pl.when(l == pl.num_programs(1) - 1)
        def _():
            o = _layer_norm(h, lnf_w_ref[...], lnf_b_ref[...])
            o_ref[...] = o.reshape(b_tile, S, D)

    return kernel


# ------------------------------- parameters --------------------------------

def init_params(key, num_layers, embedding_dim, sequence_length,
                use_positional_encoding=False):
    D, L = embedding_dim, num_layers
    std = 0.02
    proj_std = 0.02 / math.sqrt(2 * num_layers)
    keys = iter(jax.random.split(key, 8))

    def normal(shape, s=std):
        return (s * jax.random.normal(next(keys), shape)).astype(jnp.float32)

    params = {
        'ln1_w': jnp.ones((L, D), jnp.float32),
        'ln1_b': jnp.zeros((L, D), jnp.float32),
        'qkv_w': normal((L, D, 3 * D)),
        'qkv_b': jnp.zeros((L, 3 * D), jnp.float32),
        'attnp_w': normal((L, D, D), proj_std),
        'attnp_b': jnp.zeros((L, D), jnp.float32),
        'ln2_w': jnp.ones((L, D), jnp.float32),
        'ln2_b': jnp.zeros((L, D), jnp.float32),
        'fc_w': normal((L, D, 4 * D)),
        'fc_b': jnp.zeros((L, 4 * D), jnp.float32),
        'proj_w': normal((L, 4 * D, D), proj_std),
        'proj_b': jnp.zeros((L, D), jnp.float32),
        'lnf_w': jnp.ones((D,), jnp.float32),
        'lnf_b': jnp.zeros((D,), jnp.float32),
    }
    if use_positional_encoding:
        params['pos'] = normal((sequence_length, D))
    else:
        params['pos'] = jnp.zeros((sequence_length, D), jnp.float32)
    return params


# --------------------------------- wrapper ---------------------------------

@partial(jax.jit, static_argnames=('num_layers', 'num_heads', 'is_causal', 'b_tile'))
def pico_gpt_forward(x, params, *, num_layers, num_heads, is_causal=True,
                     b_tile=None):
    B, S, D = x.shape
    L = num_layers
    assert D % num_heads == 0
    bf16 = jnp.bfloat16

    if b_tile is None:
        # Keep >=2 blocks on the parallel batch axis when possible (v7x has two
        # TensorCores); otherwise fold the whole batch into one block so the
        # per-layer weights are DMA'd exactly once per layer.
        b_tile = B // 2 if (B % 2 == 0 and B >= 2) else B
    assert B % b_tile == 0

    # Host-side weight prep (zero kernel cost): bf16 matmul weights (halves
    # HBM->VMEM bytes), lane-dense 2-D biases / LN params.
    pos = params['pos'][:S]
    args = (
        x, pos,
        params['ln1_w'].reshape(L, 1, D), params['ln1_b'].reshape(L, 1, D),
        params['qkv_w'].astype(bf16), params['qkv_b'].reshape(L, 1, 3 * D),
        params['attnp_w'].astype(bf16), params['attnp_b'].reshape(L, 1, D),
        params['ln2_w'].reshape(L, 1, D), params['ln2_b'].reshape(L, 1, D),
        params['fc_w'].astype(bf16), params['fc_b'].reshape(L, 1, 4 * D),
        params['proj_w'].astype(bf16), params['proj_b'].reshape(L, 1, D),
        params['lnf_w'].reshape(1, D), params['lnf_b'].reshape(1, D),
    )

    def per_layer(*blk):
        zeros = (0,) * len(blk)
        return pl.BlockSpec((None,) + blk, lambda b, l, z=zeros: (l,) + z)

    in_specs = [
        pl.BlockSpec((b_tile, S, D), lambda b, l: (b, 0, 0)),          # x
        pl.BlockSpec((S, D), lambda b, l: (0, 0)),                     # pos
        per_layer(1, D), per_layer(1, D),                              # ln1 w,b
        per_layer(D, 3 * D), per_layer(1, 3 * D),                      # qkv w,b
        per_layer(D, D), per_layer(1, D),                              # attn proj w,b
        per_layer(1, D), per_layer(1, D),                              # ln2 w,b
        per_layer(D, 4 * D), per_layer(1, 4 * D),                      # fc w,b
        per_layer(4 * D, D), per_layer(1, D),                          # mlp proj w,b
        pl.BlockSpec((1, D), lambda b, l: (0, 0)),                     # lnf_w
        pl.BlockSpec((1, D), lambda b, l: (0, 0)),                     # lnf_b
    ]

    return pl.pallas_call(
        _make_kernel(num_heads, is_causal, b_tile, S, D),
        out_shape=jax.ShapeDtypeStruct((B, S, D), jnp.float32),
        grid=(B // b_tile, L),
        in_specs=in_specs,
        out_specs=pl.BlockSpec((b_tile, S, D), lambda b, l: (b, 0, 0)),
        scratch_shapes=[pltpu.VMEM((b_tile * S, D), jnp.float32)],     # residual carry
        compiler_params=pltpu.CompilerParams(
            dimension_semantics=("parallel", "arbitrary"),
            vmem_limit_bytes=48 * 1024 * 1024),
    )(*args)


# ------------------------- pure-JAX reference check -------------------------

def reference_forward(x, params, num_layers, num_heads, is_causal=True):
    B, S, D = x.shape
    hd = D // num_heads
    h = x + params['pos'][:S][None]
    mask = jnp.tril(jnp.ones((S, S), bool))
    for l in range(num_layers):
        a = _layer_norm(h, params['ln1_w'][l], params['ln1_b'][l])
        qkv = jnp.einsum('bse,ef->bsf', a, params['qkv_w'][l]) + params['qkv_b'][l]
        q, k, v = jnp.split(qkv, 3, axis=-1)
        q = q.reshape(B, S, num_heads, hd).transpose(0, 2, 1, 3)
        k = k.reshape(B, S, num_heads, hd).transpose(0, 2, 1, 3)
        v = v.reshape(B, S, num_heads, hd).transpose(0, 2, 1, 3)
        sc = jnp.einsum('bhqd,bhkd->bhqk', q, k) / math.sqrt(hd)
        if is_causal:
            sc = jnp.where(mask[None, None], sc, -1e30)
        p = jax.nn.softmax(sc, axis=-1)
        y = jnp.einsum('bhqk,bhkd->bhqd', p, v).transpose(0, 2, 1, 3).reshape(B, S, D)
        y = jnp.einsum('bse,ef->bsf', y, params['attnp_w'][l]) + params['attnp_b'][l]
        h = h + y
        m = _layer_norm(h, params['ln2_w'][l], params['ln2_b'][l])
        m = jnp.einsum('bse,ef->bsf', m, params['fc_w'][l]) + params['fc_b'][l]
        m = _new_gelu(m)
        m = jnp.einsum('bsf,fe->bse', m, params['proj_w'][l]) + params['proj_b'][l]
        h = h + m
    return _layer_norm(h, params['lnf_w'], params['lnf_b'])


# ----------------------------------- main -----------------------------------

if __name__ == "__main__":
    B, S = 2, 8
    num_layers, num_heads, embedding_dim = 2, 4, 128   # D = 128 keeps lanes dense

    key = jax.random.PRNGKey(0)
    kx, kp = jax.random.split(key)
    x = jax.random.normal(kx, (B, S, embedding_dim), dtype=jnp.float32)
    params = init_params(kp, num_layers, embedding_dim, sequence_length=S,
                         use_positional_encoding=True)

    out = pico_gpt_forward(x, params, num_layers=num_layers,
                           num_heads=num_heads, is_causal=True)
    out = jax.block_until_ready(out)

    ref = reference_forward(x, params, num_layers, num_heads, is_causal=True)
    assert out.shape == (B, S, embedding_dim)
    max_err = jnp.max(jnp.abs(out - ref))
    # bf16 MXU operands (f32 accumulation) => relaxed tolerance.
    assert jnp.allclose(out, ref, atol=2e-2, rtol=2e-2), \
        f"mismatch vs reference (max abs err {max_err})"

    print("KERNEL_OK")
</pallas_src>

<mosaic_0001>
module attributes {stable_mosaic.version = 11 : i64} {
  func.func @kernel(%arg0: i32, %arg1: i32, %arg2: memref<1x8x128xf32, #tpu.memory_space<vmem>>, %arg3: memref<8x128xf32, #tpu.memory_space<vmem>>, %arg4: memref<1x1x128xf32, #tpu.memory_space<vmem>>, %arg5: memref<1x1x128xf32, #tpu.memory_space<vmem>>, %arg6: memref<1x128x384xbf16, #tpu.memory_space<vmem>>, %arg7: memref<1x1x384xf32, #tpu.memory_space<vmem>>, %arg8: memref<1x128x128xbf16, #tpu.memory_space<vmem>>, %arg9: memref<1x1x128xf32, #tpu.memory_space<vmem>>, %arg10: memref<1x1x128xf32, #tpu.memory_space<vmem>>, %arg11: memref<1x1x128xf32, #tpu.memory_space<vmem>>, %arg12: memref<1x128x512xbf16, #tpu.memory_space<vmem>>, %arg13: memref<1x1x512xf32, #tpu.memory_space<vmem>>, %arg14: memref<1x512x128xbf16, #tpu.memory_space<vmem>>, %arg15: memref<1x1x128xf32, #tpu.memory_space<vmem>>, %arg16: memref<1x128xf32, #tpu.memory_space<vmem>>, %arg17: memref<1x128xf32, #tpu.memory_space<vmem>>, %arg18: memref<1x8x128xf32, #tpu.memory_space<vmem>>, %arg19: memref<8x128xf32, #tpu.memory_space<vmem>>) attributes {dimension_semantics = [#tpu.dimension_semantics<parallel>, #tpu.dimension_semantics<arbitrary>], iteration_bounds = array<i64: 2, 2>, scalar_prefetch = 0 : i64, scratch_operands = 1 : i64, tpu.core_type = #tpu.core_type<tc>, window_params = [{transform_indices = @transform_0, window_bounds = array<i64: 1, 8, 128>}, {pipeline_mode = #tpu.pipeline_mode<synchronous>, transform_indices = @transform_1, window_bounds = array<i64: 8, 128>}, {transform_indices = @transform_2, window_bounds = array<i64: 1, 1, 128>}, {transform_indices = @transform_3, window_bounds = array<i64: 1, 1, 128>}, {transform_indices = @transform_4, window_bounds = array<i64: 1, 128, 384>}, {transform_indices = @transform_5, window_bounds = array<i64: 1, 1, 384>}, {transform_indices = @transform_6, window_bounds = array<i64: 1, 128, 128>}, {transform_indices = @transform_7, window_bounds = array<i64: 1, 1, 128>}, {transform_indices = @transform_8, window_bounds = array<i64: 1, 1, 128>}, {transform_indices = @transform_9, window_bounds = array<i64: 1, 1, 128>}, {transform_indices = @transform_10, window_bounds = array<i64: 1, 128, 512>}, {transform_indices = @transform_11, window_bounds = array<i64: 1, 1, 512>}, {transform_indices = @transform_12, window_bounds = array<i64: 1, 512, 128>}, {transform_indices = @transform_13, window_bounds = array<i64: 1, 1, 128>}, {pipeline_mode = #tpu.pipeline_mode<synchronous>, transform_indices = @transform_14, window_bounds = array<i64: 1, 128>}, {pipeline_mode = #tpu.pipeline_mode<synchronous>, transform_indices = @transform_15, window_bounds = array<i64: 1, 128>}, {transform_indices = @transform_16, window_bounds = array<i64: 1, 8, 128>}]} {
    %c0_i32 = arith.constant 0 : i32
    %0 = arith.cmpi eq, %arg1, %c0_i32 : i32
    %1 = arith.extui %0 : i1 to i32
    %c0_i32_0 = arith.constant 0 : i32
    %2 = arith.cmpi ne, %1, %c0_i32_0 : i32
    scf.if %2 {
      %c0_80 = arith.constant 0 : index
      %c0_81 = arith.constant 0 : index
      %c0_82 = arith.constant 0 : index
      %215 = vector.load %arg2[%c0_80, %c0_81, %c0_82] : memref<1x8x128xf32, #tpu.memory_space<vmem>>, vector<1x8x128xf32>
      %c0_83 = arith.constant 0 : index
      %c0_84 = arith.constant 0 : index
      %216 = vector.load %arg3[%c0_83, %c0_84] : memref<8x128xf32, #tpu.memory_space<vmem>>, vector<8x128xf32>
      %217 = vector.shape_cast %216 : vector<8x128xf32> to vector<1x8x128xf32>
      %218 = arith.addf %215, %217 : vector<1x8x128xf32>
      %219 = vector.shape_cast %218 : vector<1x8x128xf32> to vector<8x128xf32>
      %c0_85 = arith.constant 0 : index
      %c0_86 = arith.constant 0 : index
      %220 = vector.load %arg19[%c0_85, %c0_86] : memref<8x128xf32, #tpu.memory_space<vmem>>, vector<8x128xf32>
      tpu.vector_store %arg19[%c0_85, %c0_86], %219 {strides = array<i32>} : memref<8x128xf32, #tpu.memory_space<vmem>>, vector<8x128xf32>,
    } else {
    }
    %c0 = arith.constant 0 : index
    %c0_1 = arith.constant 0 : index
    %3 = vector.load %arg19[%c0, %c0_1] : memref<8x128xf32, #tpu.memory_space<vmem>>, vector<8x128xf32>
    %c0_2 = arith.constant 0 : index
    %c0_3 = arith.constant 0 : index
    %c0_4 = arith.constant 0 : index
    %4 = vector.load %arg4[%c0_2, %c0_3, %c0_4] : memref<1x1x128xf32, #tpu.memory_space<vmem>>, vector<1x1x128xf32>
    %5 = vector.shape_cast %4 : vector<1x1x128xf32> to vector<1x128xf32>
    %c0_5 = arith.constant 0 : index
    %c0_6 = arith.constant 0 : index
    %c0_7 = arith.constant 0 : index
    %6 = vector.load %arg5[%c0_5, %c0_6, %c0_7] : memref<1x1x128xf32, #tpu.memory_space<vmem>>, vector<1x1x128xf32>
    %7 = vector.shape_cast %6 : vector<1x1x128xf32> to vector<1x128xf32>
    %cst = arith.constant dense<0.000000e+00> : vector<8xf32>
    %8 = vector.multi_reduction <add>, %3, %cst [1] : vector<8x128xf32> to vector<8xf32>
    %9 = vector.shape_cast %8 : vector<8xf32> to vector<8x1xf32>
    %cst_8 = arith.constant 1.280000e+02 : f32
    %10 = vector.broadcast %cst_8 : f32 to vector<8x1xf32>
    %11 = arith.divf %9, %10 : vector<8x1xf32>
    %12 = vector.broadcast %11 : vector<8x1xf32> to vector<8x128xf32>
    %13 = arith.subf %3, %12 : vector<8x128xf32>
    %14 = arith.mulf %13, %13 : vector<8x128xf32>
    %cst_9 = arith.constant dense<0.000000e+00> : vector<8xf32>
    %15 = vector.multi_reduction <add>, %14, %cst_9 [1] : vector<8x128xf32> to vector<8xf32>
    %16 = vector.shape_cast %15 : vector<8xf32> to vector<8x1xf32>
    %cst_10 = arith.constant 1.280000e+02 : f32
    %17 = vector.broadcast %cst_10 : f32 to vector<8x1xf32>
    %18 = arith.divf %16, %17 : vector<8x1xf32>
    %19 = vector.broadcast %11 : vector<8x1xf32> to vector<8x128xf32>
    %20 = arith.subf %3, %19 : vector<8x128xf32>
    %cst_11 = arith.constant 9.99999974E-6 : f32
    %21 = vector.broadcast %cst_11 : f32 to vector<8x1xf32>
    %22 = arith.addf %18, %21 : vector<8x1xf32>
    %23 = math.rsqrt %22 : vector<8x1xf32>
    %24 = vector.broadcast %23 : vector<8x1xf32> to vector<8x128xf32>
    %25 = arith.mulf %20, %24 : vector<8x128xf32>
    %26 = vector.broadcast %5 : vector<1x128xf32> to vector<8x128xf32>
    %27 = arith.mulf %25, %26 : vector<8x128xf32>
    %28 = vector.broadcast %7 : vector<1x128xf32> to vector<8x128xf32>
    %29 = arith.addf %27, %28 : vector<8x128xf32>
    %30 = arith.truncf %29 : vector<8x128xf32> to vector<8x128xbf16>
    %c0_12 = arith.constant 0 : index
    %c0_13 = arith.constant 0 : index
    %c0_14 = arith.constant 0 : index
    %31 = vector.load %arg6[%c0_12, %c0_13, %c0_14] : memref<1x128x384xbf16, #tpu.memory_space<vmem>>, vector<1x128x384xbf16>
    %32 = vector.shape_cast %31 : vector<1x128x384xbf16> to vector<128x384xbf16>
    %cst_15 = arith.constant dense<0.000000e+00> : vector<8x384xf32>
    %33 = tpu.matmul %30, %32, %cst_15 {dimension_numbers = #tpu.dot_dimension_numbers<[1], [0], [0], [1], [0, 0, 1, 1], [], []>} : vector<8x128xbf16>, vector<128x384xbf16>, vector<8x384xf32> -> vector<8x384xf32>
    %c0_16 = arith.constant 0 : index
    %c0_17 = arith.constant 0 : index
    %c0_18 = arith.constant 0 : index
    %34 = vector.load %arg7[%c0_16, %c0_17, %c0_18] : memref<1x1x384xf32, #tpu.memory_space<vmem>>, vector<1x1x384xf32>
    %35 = vector.shape_cast %34 : vector<1x1x384xf32> to vector<1x384xf32>
    %36 = vector.broadcast %35 : vector<1x384xf32> to vector<8x384xf32>
    %37 = arith.addf %33, %36 : vector<8x384xf32>
    %38 = tpu.iota {dimensions = array<i32: 0>} : vector<8x8xi32>
    %39 = tpu.iota {dimensions = array<i32: 1>} : vector<8x8xi32>
    %40 = arith.cmpi sle, %39, %38 : vector<8x8xi32>
    %cst_19 = arith.constant 0.000000e+00 : f32
    %cst_20 = arith.constant -1.000000e+30 : f32
    %41 = vector.broadcast %cst_19 : f32 to vector<8x8xf32>
    %42 = vector.broadcast %cst_20 : f32 to vector<8x8xf32>
    %43 = arith.select %40, %41, %42 : vector<8x8xi1>, vector<8x8xf32>
    %44 = vector.shape_cast %43 : vector<8x8xf32> to vector<1x8x8xf32>
    %45 = vector.extract_strided_slice %37 {offsets = [0, 0], sizes = [8, 32], strides = [1, 1]} : vector<8x384xf32> to vector<8x32xf32>
    %46 = vector.shape_cast %45 : vector<8x32xf32> to vector<1x8x32xf32>
    %47 = vector.extract_strided_slice %37 {offsets = [0, 128], sizes = [8, 32], strides = [1, 1]} : vector<8x384xf32> to vector<8x32xf32>
    %48 = vector.shape_cast %47 : vector<8x32xf32> to vector<1x8x32xf32>
    %49 = vector.extract_strided_slice %37 {offsets = [0, 256], sizes = [8, 32], strides = [1, 1]} : vector<8x384xf32> to vector<8x32xf32>
    %50 = vector.shape_cast %49 : vector<8x32xf32> to vector<1x8x32xf32>
    %51 = arith.truncf %46 : vector<1x8x32xf32> to vector<1x8x32xbf16>
    %52 = arith.truncf %48 : vector<1x8x32xf32> to vector<1x8x32xbf16>
    "tpu.trace_start"() <{level = 10 : i32, message = "bqd,bkd->bqk"}> : () -> ()
    %cst_21 = arith.constant dense<0.000000e+00> : vector<1x8x8xf32>
    %53 = tpu.matmul %51, %52, %cst_21 {dimension_numbers = #tpu.dot_dimension_numbers<[2], [2], [1], [1], [0, 0, 0, 1, 1, 1], [0], [0]>} : vector<1x8x32xbf16>, vector<1x8x32xbf16>, vector<1x8x8xf32> -> vector<1x8x8xf32>
    "tpu.trace_stop"() : () -> ()
    %cst_22 = arith.constant 0.176776692 : f32
    %54 = vector.broadcast %cst_22 : f32 to vector<1x8x8xf32>
    %55 = arith.mulf %53, %54 : vector<1x8x8xf32>
    %56 = arith.addf %55, %44 : vector<1x8x8xf32>
    %cst_23 = arith.constant dense<0xFF800000> : vector<1x8xf32>
    %57 = vector.multi_reduction <maximumf>, %56, %cst_23 [2] : vector<1x8x8xf32> to vector<1x8xf32>
    %58 = vector.shape_cast %57 : vector<1x8xf32> to vector<1x8x1xf32>
    %59 = vector.broadcast %58 : vector<1x8x1xf32> to vector<1x8x8xf32>
    %60 = arith.subf %56, %59 : vector<1x8x8xf32>
    %61 = math.exp %60 : vector<1x8x8xf32>
    %cst_24 = arith.constant dense<0.000000e+00> : vector<1x8xf32>
    %62 = vector.multi_reduction <add>, %61, %cst_24 [2] : vector<1x8x8xf32> to vector<1x8xf32>
    %63 = vector.shape_cast %62 : vector<1x8xf32> to vector<1x8x1xf32>
    %64 = vector.broadcast %63 : vector<1x8x1xf32> to vector<1x8x8xf32>
    %65 = arith.divf %61, %64 : vector<1x8x8xf32>
    %66 = arith.truncf %65 : vector<1x8x8xf32> to vector<1x8x8xbf16>
    %67 = arith.truncf %50 : vector<1x8x32xf32> to vector<1x8x32xbf16>
    "tpu.trace_start"() <{level = 10 : i32, message = "bqk,bkd->bqd"}> : () -> ()
    %cst_25 = arith.constant dense<0.000000e+00> : vector<1x8x32xf32>
    %68 = tpu.matmul %66, %67, %cst_25 {dimension_numbers = #tpu.dot_dimension_numbers<[2], [1], [1], [2], [0, 0, 0, 1, 1, 2], [0], [0]>} : vector<1x8x8xbf16>, vector<1x8x32xbf16>, vector<1x8x32xf32> -> vector<1x8x32xf32>
    "tpu.trace_stop"() : () -> ()
    %69 = vector.shape_cast %68 : vector<1x8x32xf32> to vector<8x32xf32>
    %70 = vector.extract_strided_slice %37 {offsets = [0, 32], sizes = [8, 32], strides = [1, 1]} : vector<8x384xf32> to vector<8x32xf32>
    %71 = vector.shape_cast %70 : vector<8x32xf32> to vector<1x8x32xf32>
    %72 = vector.extract_strided_slice %37 {offsets = [0, 160], sizes = [8, 32], strides = [1, 1]} : vector<8x384xf32> to vector<8x32xf32>
    %73 = vector.shape_cast %72 : vector<8x32xf32> to vector<1x8x32xf32>
    %74 = vector.extract_strided_slice %37 {offsets = [0, 288], sizes = [8, 32], strides = [1, 1]} : vector<8x384xf32> to vector<8x32xf32>
    %75 = vector.shape_cast %74 : vector<8x32xf32> to vector<1x8x32xf32>
    %76 = arith.truncf %71 : vector<1x8x32xf32> to vector<1x8x32xbf16>
    %77 = arith.truncf %73 : vector<1x8x32xf32> to vector<1x8x32xbf16>
    "tpu.trace_start"() <{level = 10 : i32, message = "bqd,bkd->bqk"}> : () -> ()
    %cst_26 = arith.constant dense<0.000000e+00> : vector<1x8x8xf32>
    %78 = tpu.matmul %76, %77, %cst_26 {dimension_numbers = #tpu.dot_dimension_numbers<[2], [2], [1], [1], [0, 0, 0, 1, 1, 1], [0], [0]>} : vector<1x8x32xbf16>, vector<1x8x32xbf16>, vector<1x8x8xf32> -> vector<1x8x8xf32>
    "tpu.trace_stop"() : () -> ()
    %cst_27 = arith.constant 0.176776692 : f32
    %79 = vector.broadcast %cst_27 : f32 to vector<1x8x8xf32>
    %80 = arith.mulf %78, %79 : vector<1x8x8xf32>
    %81 = arith.addf %80, %44 : vector<1x8x8xf32>
    %cst_28 = arith.constant dense<0xFF800000> : vector<1x8xf32>
    %82 = vector.multi_reduction <maximumf>, %81, %cst_28 [2] : vector<1x8x8xf32> to vector<1x8xf32>
    %83 = vector.shape_cast %82 : vector<1x8xf32> to vector<1x8x1xf32>
    %84 = vector.broadcast %83 : vector<1x8x1xf32> to vector<1x8x8xf32>
    %85 = arith.subf %81, %84 : vector<1x8x8xf32>
    %86 = math.exp %85 : vector<1x8x8xf32>
    %cst_29 = arith.constant dense<0.000000e+00> : vector<1x8xf32>
    %87 = vector.multi_reduction <add>, %86, %cst_29 [2] : vector<1x8x8xf32> to vector<1x8xf32>
    %88 = vector.shape_cast %87 : vector<1x8xf32> to vector<1x8x1xf32>
    %89 = vector.broadcast %88 : vector<1x8x1xf32> to vector<1x8x8xf32>
    %90 = arith.divf %86, %89 : vector<1x8x8xf32>
    %91 = arith.truncf %90 : vector<1x8x8xf32> to vector<1x8x8xbf16>
    %92 = arith.truncf %75 : vector<1x8x32xf32> to vector<1x8x32xbf16>
    "tpu.trace_start"() <{level = 10 : i32, message = "bqk,bkd->bqd"}> : () -> ()
    %cst_30 = arith.constant dense<0.000000e+00> : vector<1x8x32xf32>
    %93 = tpu.matmul %91, %92, %cst_30 {dimension_numbers = #tpu.dot_dimension_numbers<[2], [1], [1], [2], [0, 0, 0, 1, 1, 2], [0], [0]>} : vector<1x8x8xbf16>, vector<1x8x32xbf16>, vector<1x8x32xf32> -> vector<1x8x32xf32>
    "tpu.trace_stop"() : () -> ()
    %94 = vector.shape_cast %93 : vector<1x8x32xf32> to vector<8x32xf32>
    %95 = vector.extract_strided_slice %37 {offsets = [0, 64], sizes = [8, 32], strides = [1, 1]} : vector<8x384xf32> to vector<8x32xf32>
    %96 = vector.shape_cast %95 : vector<8x32xf32> to vector<1x8x32xf32>
    %97 = vector.extract_strided_slice %37 {offsets = [0, 192], sizes = [8, 32], strides = [1, 1]} : vector<8x384xf32> to vector<8x32xf32>
    %98 = vector.shape_cast %97 : vector<8x32xf32> to vector<1x8x32xf32>
    %99 = vector.extract_strided_slice %37 {offsets = [0, 320], sizes = [8, 32], strides = [1, 1]} : vector<8x384xf32> to vector<8x32xf32>
    %100 = vector.shape_cast %99 : vector<8x32xf32> to vector<1x8x32xf32>
    %101 = arith.truncf %96 : vector<1x8x32xf32> to vector<1x8x32xbf16>
    %102 = arith.truncf %98 : vector<1x8x32xf32> to vector<1x8x32xbf16>
    "tpu.trace_start"() <{level = 10 : i32, message = "bqd,bkd->bqk"}> : () -> ()
    %cst_31 = arith.constant dense<0.000000e+00> : vector<1x8x8xf32>
    %103 = tpu.matmul %101, %102, %cst_31 {dimension_numbers = #tpu.dot_dimension_numbers<[2], [2], [1], [1], [0, 0, 0, 1, 1, 1], [0], [0]>} : vector<1x8x32xbf16>, vector<1x8x32xbf16>, vector<1x8x8xf32> -> vector<1x8x8xf32>
    "tpu.trace_stop"() : () -> ()
    %cst_32 = arith.constant 0.176776692 : f32
    %104 = vector.broadcast %cst_32 : f32 to vector<1x8x8xf32>
    %105 = arith.mulf %103, %104 : vector<1x8x8xf32>
    %106 = arith.addf %105, %44 : vector<1x8x8xf32>
    %cst_33 = arith.constant dense<0xFF800000> : vector<1x8xf32>
    %107 = vector.multi_reduction <maximumf>, %106, %cst_33 [2] : vector<1x8x8xf32> to vector<1x8xf32>
    %108 = vector.shape_cast %107 : vector<1x8xf32> to vector<1x8x1xf32>
    %109 = vector.broadcast %108 : vector<1x8x1xf32> to vector<1x8x8xf32>
    %110 = arith.subf %106, %109 : vector<1x8x8xf32>
    %111 = math.exp %110 : vector<1x8x8xf32>
    %cst_34 = arith.constant dense<0.000000e+00> : vector<1x8xf32>
    %112 = vector.multi_reduction <add>, %111, %cst_34 [2] : vector<1x8x8xf32> to vector<1x8xf32>
    %113 = vector.shape_cast %112 : vector<1x8xf32> to vector<1x8x1xf32>
    %114 = vector.broadcast %113 : vector<1x8x1xf32> to vector<1x8x8xf32>
    %115 = arith.divf %111, %114 : vector<1x8x8xf32>
    %116 = arith.truncf %115 : vector<1x8x8xf32> to vector<1x8x8xbf16>
    %117 = arith.truncf %100 : vector<1x8x32xf32> to vector<1x8x32xbf16>
    "tpu.trace_start"() <{level = 10 : i32, message = "bqk,bkd->bqd"}> : () -> ()
    %cst_35 = arith.constant dense<0.000000e+00> : vector<1x8x32xf32>
    %118 = tpu.matmul %116, %117, %cst_35 {dimension_numbers = #tpu.dot_dimension_numbers<[2], [1], [1], [2], [0, 0, 0, 1, 1, 2], [0], [0]>} : vector<1x8x8xbf16>, vector<1x8x32xbf16>, vector<1x8x32xf32> -> vector<1x8x32xf32>
    "tpu.trace_stop"() : () -> ()
    %119 = vector.shape_cast %118 : vector<1x8x32xf32> to vector<8x32xf32>
    %120 = vector.extract_strided_slice %37 {offsets = [0, 96], sizes = [8, 32], strides = [1, 1]} : vector<8x384xf32> to vector<8x32xf32>
    %121 = vector.shape_cast %120 : vector<8x32xf32> to vector<1x8x32xf32>
    %122 = vector.extract_strided_slice %37 {offsets = [0, 224], sizes = [8, 32], strides = [1, 1]} : vector<8x384xf32> to vector<8x32xf32>
    %123 = vector.shape_cast %122 : vector<8x32xf32> to vector<1x8x32xf32>
    %124 = vector.extract_strided_slice %37 {offsets = [0, 352], sizes = [8, 32], strides = [1, 1]} : vector<8x384xf32> to vector<8x32xf32>
    %125 = vector.shape_cast %124 : vector<8x32xf32> to vector<1x8x32xf32>
    %126 = arith.truncf %121 : vector<1x8x32xf32> to vector<1x8x32xbf16>
    %127 = arith.truncf %123 : vector<1x8x32xf32> to vector<1x8x32xbf16>
    "tpu.trace_start"() <{level = 10 : i32, message = "bqd,bkd->bqk"}> : () -> ()
    %cst_36 = arith.constant dense<0.000000e+00> : vector<1x8x8xf32>
    %128 = tpu.matmul %126, %127, %cst_36 {dimension_numbers = #tpu.dot_dimension_numbers<[2], [2], [1], [1], [0, 0, 0, 1, 1, 1], [0], [0]>} : vector<1x8x32xbf16>, vector<1x8x32xbf16>, vector<1x8x8xf32> -> vector<1x8x8xf32>
    "tpu.trace_stop"() : () -> ()
    %cst_37 = arith.constant 0.176776692 : f32
    %129 = vector.broadcast %cst_37 : f32 to vector<1x8x8xf32>
    %130 = arith.mulf %128, %129 : vector<1x8x8xf32>
    %131 = arith.addf %130, %44 : vector<1x8x8xf32>
    %cst_38 = arith.constant dense<0xFF800000> : vector<1x8xf32>
    %132 = vector.multi_reduction <maximumf>, %131, %cst_38 [2] : vector<1x8x8xf32> to vector<1x8xf32>
    %133 = vector.shape_cast %132 : vector<1x8xf32> to vector<1x8x1xf32>
    %134 = vector.broadcast %133 : vector<1x8x1xf32> to vector<1x8x8xf32>
    %135 = arith.subf %131, %134 : vector<1x8x8xf32>
    %136 = math.exp %135 : vector<1x8x8xf32>
    %cst_39 = arith.constant dense<0.000000e+00> : vector<1x8xf32>
    %137 = vector.multi_reduction <add>, %136, %cst_39 [2] : vector<1x8x8xf32> to vector<1x8xf32>
    %138 = vector.shape_cast %137 : vector<1x8xf32> to vector<1x8x1xf32>
    %139 = vector.broadcast %138 : vector<1x8x1xf32> to vector<1x8x8xf32>
    %140 = arith.divf %136, %139 : vector<1x8x8xf32>
    %141 = arith.truncf %140 : vector<1x8x8xf32> to vector<1x8x8xbf16>
    %142 = arith.truncf %125 : vector<1x8x32xf32> to vector<1x8x32xbf16>
    "tpu.trace_start"() <{level = 10 : i32, message = "bqk,bkd->bqd"}> : () -> ()
    %cst_40 = arith.constant dense<0.000000e+00> : vector<1x8x32xf32>
    %143 = tpu.matmul %141, %142, %cst_40 {dimension_numbers = #tpu.dot_dimension_numbers<[2], [1], [1], [2], [0, 0, 0, 1, 1, 2], [0], [0]>} : vector<1x8x8xbf16>, vector<1x8x32xbf16>, vector<1x8x32xf32> -> vector<1x8x32xf32>
    "tpu.trace_stop"() : () -> ()
    %144 = vector.shape_cast %143 : vector<1x8x32xf32> to vector<8x32xf32>
    %145 = tpu.concatenate %69, %94, %119, %144 in 1 : vector<8x32xf32>, vector<8x32xf32>, vector<8x32xf32>, vector<8x32xf32> -> vector<8x128xf32>
    %146 = arith.truncf %145 : vector<8x128xf32> to vector<8x128xbf16>
    %c0_41 = arith.constant 0 : index
    %c0_42 = arith.constant 0 : index
    %c0_43 = arith.constant 0 : index
    %147 = vector.load %arg8[%c0_41, %c0_42, %c0_43] : memref<1x128x128xbf16, #tpu.memory_space<vmem>>, vector<1x128x128xbf16>
    %148 = vector.shape_cast %147 : vector<1x128x128xbf16> to vector<128x128xbf16>
    %cst_44 = arith.constant dense<0.000000e+00> : vector<8x128xf32>
    %149 = tpu.matmul %146, %148, %cst_44 {dimension_numbers = #tpu.dot_dimension_numbers<[1], [0], [0], [1], [0, 0, 1, 1], [], []>} : vector<8x128xbf16>, vector<128x128xbf16>, vector<8x128xf32> -> vector<8x128xf32>
    %c0_45 = arith.constant 0 : index
    %c0_46 = arith.constant 0 : index
    %c0_47 = arith.constant 0 : index
    %150 = vector.load %arg9[%c0_45, %c0_46, %c0_47] : memref<1x1x128xf32, #tpu.memory_space<vmem>>, vector<1x1x128xf32>
    %151 = vector.shape_cast %150 : vector<1x1x128xf32> to vector<1x128xf32>
    %152 = vector.broadcast %151 : vector<1x128xf32> to vector<8x128xf32>
    %153 = arith.addf %149, %152 : vector<8x128xf32>
    %154 = arith.addf %3, %153 : vector<8x128xf32>
    %c0_48 = arith.constant 0 : index
    %c0_49 = arith.constant 0 : index
    %c0_50 = arith.constant 0 : index
    %155 = vector.load %arg10[%c0_48, %c0_49, %c0_50] : memref<1x1x128xf32, #tpu.memory_space<vmem>>, vector<1x1x128xf32>
    %156 = vector.shape_cast %155 : vector<1x1x128xf32> to vector<1x128xf32>
    %c0_51 = arith.constant 0 : index
    %c0_52 = arith.constant 0 : index
    %c0_53 = arith.constant 0 : index
    %157 = vector.load %arg11[%c0_51, %c0_52, %c0_53] : memref<1x1x128xf32, #tpu.memory_space<vmem>>, vector<1x1x128xf32>
    %158 = vector.shape_cast %157 : vector<1x1x128xf32> to vector<1x128xf32>
    %cst_54 = arith.constant dense<0.000000e+00> : vector<8xf32>
    %159 = vector.multi_reduction <add>, %154, %cst_54 [1] : vector<8x128xf32> to vector<8xf32>
    %160 = vector.shape_cast %159 : vector<8xf32> to vector<8x1xf32>
    %cst_55 = arith.constant 1.280000e+02 : f32
    %161 = vector.broadcast %cst_55 : f32 to vector<8x1xf32>
    %162 = arith.divf %160, %161 : vector<8x1xf32>
    %163 = vector.broadcast %162 : vector<8x1xf32> to vector<8x128xf32>
    %164 = arith.subf %154, %163 : vector<8x128xf32>
    %165 = arith.mulf %164, %164 : vector<8x128xf32>
    %cst_56 = arith.constant dense<0.000000e+00> : vector<8xf32>
    %166 = vector.multi_reduction <add>, %165, %cst_56 [1] : vector<8x128xf32> to vector<8xf32>
    %167 = vector.shape_cast %166 : vector<8xf32> to vector<8x1xf32>
    %cst_57 = arith.constant 1.280000e+02 : f32
    %168 = vector.broadcast %cst_57 : f32 to vector<8x1xf32>
    %169 = arith.divf %167, %168 : vector<8x1xf32>
    %170 = vector.broadcast %162 : vector<8x1xf32> to vector<8x128xf32>
    %171 = arith.subf %154, %170 : vector<8x128xf32>
    %cst_58 = arith.constant 9.99999974E-6 : f32
    %172 = vector.broadcast %cst_58 : f32 to vector<8x1xf32>
    %173 = arith.addf %169, %172 : vector<8x1xf32>
    %174 = math.rsqrt %173 : vector<8x1xf32>
    %175 = vector.broadcast %174 : vector<8x1xf32> to vector<8x128xf32>
    %176 = arith.mulf %171, %175 : vector<8x128xf32>
    %177 = vector.broadcast %156 : vector<1x128xf32> to vector<8x128xf32>
    %178 = arith.mulf %176, %177 : vector<8x128xf32>
    %179 = vector.broadcast %158 : vector<1x128xf32> to vector<8x128xf32>
    %180 = arith.addf %178, %179 : vector<8x128xf32>
    %181 = arith.truncf %180 : vector<8x128xf32> to vector<8x128xbf16>
    %c0_59 = arith.constant 0 : index
    %c0_60 = arith.constant 0 : index
    %c0_61 = arith.constant 0 : index
    %182 = vector.load %arg12[%c0_59, %c0_60, %c0_61] : memref<1x128x512xbf16, #tpu.memory_space<vmem>>, vector<1x128x512xbf16>
    %183 = vector.shape_cast %182 : vector<1x128x512xbf16> to vector<128x512xbf16>
    %cst_62 = arith.constant dense<0.000000e+00> : vector<8x512xf32>
    %184 = tpu.matmul %181, %183, %cst_62 {dimension_numbers = #tpu.dot_dimension_numbers<[1], [0], [0], [1], [0, 0, 1, 1], [], []>} : vector<8x128xbf16>, vector<128x512xbf16>, vector<8x512xf32> -> vector<8x512xf32>
    %c0_63 = arith.constant 0 : index
    %c0_64 = arith.constant 0 : index
    %c0_65 = arith.constant 0 : index
    %185 = vector.load %arg13[%c0_63, %c0_64, %c0_65] : memref<1x1x512xf32, #tpu.memory_space<vmem>>, vector<1x1x512xf32>
    %186 = vector.shape_cast %185 : vector<1x1x512xf32> to vector<1x512xf32>
    %187 = vector.broadcast %186 : vector<1x512xf32> to vector<8x512xf32>
    %188 = arith.addf %184, %187 : vector<8x512xf32>
    %cst_66 = arith.constant 5.000000e-01 : f32
    %189 = vector.broadcast %cst_66 : f32 to vector<8x512xf32>
    %190 = arith.mulf %189, %188 : vector<8x512xf32>
    %191 = arith.mulf %188, %188 : vector<8x512xf32>
    %192 = arith.mulf %188, %191 : vector<8x512xf32>
    %cst_67 = arith.constant 4.471500e-02 : f32
    %193 = vector.broadcast %cst_67 : f32 to vector<8x512xf32>
    %194 = arith.mulf %193, %192 : vector<8x512xf32>
    %195 = arith.addf %188, %194 : vector<8x512xf32>
    %cst_68 = arith.constant 0.797884583 : f32
    %196 = vector.broadcast %cst_68 : f32 to vector<8x512xf32>
    %197 = arith.mulf %196, %195 : vector<8x512xf32>
    %198 = math.tanh %197 : vector<8x512xf32>
    %cst_69 = arith.constant 1.000000e+00 : f32
    %199 = vector.broadcast %cst_69 : f32 to vector<8x512xf32>
    %200 = arith.addf %199, %198 : vector<8x512xf32>
    %201 = arith.mulf %190, %200 : vector<8x512xf32>
    %202 = arith.truncf %201 : vector<8x512xf32> to vector<8x512xbf16>
    %c0_70 = arith.constant 0 : index
    %c0_71 = arith.constant 0 : index
    %c0_72 = arith.constant 0 : index
    %203 = vector.load %arg14[%c0_70, %c0_71, %c0_72] : memref<1x512x128xbf16, #tpu.memory_space<vmem>>, vector<1x512x128xbf16>
    %204 = vector.shape_cast %203 : vector<1x512x128xbf16> to vector<512x128xbf16>
    %cst_73 = arith.constant dense<0.000000e+00> : vector<8x128xf32>
    %205 = tpu.matmul %202, %204, %cst_73 {dimension_numbers = #tpu.dot_dimension_numbers<[1], [0], [0], [1], [0, 0, 1, 1], [], []>} : vector<8x512xbf16>, vector<512x128xbf16>, vector<8x128xf32> -> vector<8x128xf32>
    %c0_74 = arith.constant 0 : index
    %c0_75 = arith.constant 0 : index
    %c0_76 = arith.constant 0 : index
    %206 = vector.load %arg15[%c0_74, %c0_75, %c0_76] : memref<1x1x128xf32, #tpu.memory_space<vmem>>, vector<1x1x128xf32>
    %207 = vector.shape_cast %206 : vector<1x1x128xf32> to vector<1x128xf32>
    %208 = vector.broadcast %207 : vector<1x128xf32> to vector<8x128xf32>
    %209 = arith.addf %205, %208 : vector<8x128xf32>
    %210 = arith.addf %154, %209 : vector<8x128xf32>
    %c0_77 = arith.constant 0 : index
    %c0_78 = arith.constant 0 : index
    %211 = vector.load %arg19[%c0_77, %c0_78] : memref<8x128xf32, #tpu.memory_space<vmem>>, vector<8x128xf32>
    tpu.vector_store %arg19[%c0_77, %c0_78], %210 {strides = array<i32>} : memref<8x128xf32, #tpu.memory_space<vmem>>, vector<8x128xf32>,
    %c1_i32 = arith.constant 1 : i32
    %212 = arith.cmpi eq, %arg1, %c1_i32 : i32
    %213 = arith.extui %212 : i1 to i32
    %c0_i32_79 = arith.constant 0 : i32
    %214 = arith.cmpi ne, %213, %c0_i32_79 : i32
    scf.if %214 {
      %c0_80 = arith.constant 0 : index
      %c0_81 = arith.constant 0 : index
      %215 = vector.load %arg16[%c0_80, %c0_81] : memref<1x128xf32, #tpu.memory_space<vmem>>, vector<1x128xf32>
      %c0_82 = arith.constant 0 : index
      %c0_83 = arith.constant 0 : index
      %216 = vector.load %arg17[%c0_82, %c0_83] : memref<1x128xf32, #tpu.memory_space<vmem>>, vector<1x128xf32>
      %cst_84 = arith.constant dense<0.000000e+00> : vector<8xf32>
      %217 = vector.multi_reduction <add>, %210, %cst_84 [1] : vector<8x128xf32> to vector<8xf32>
      %218 = vector.shape_cast %217 : vector<8xf32> to vector<8x1xf32>
      %cst_85 = arith.constant 1.280000e+02 : f32
      %219 = vector.broadcast %cst_85 : f32 to vector<8x1xf32>
      %220 = arith.divf %218, %219 : vector<8x1xf32>
      %221 = vector.broadcast %220 : vector<8x1xf32> to vector<8x128xf32>
      %222 = arith.subf %210, %221 : vector<8x128xf32>
      %223 = arith.mulf %222, %222 : vector<8x128xf32>
      %cst_86 = arith.constant dense<0.000000e+00> : vector<8xf32>
      %224 = vector.multi_reduction <add>, %223, %cst_86 [1] : vector<8x128xf32> to vector<8xf32>
      %225 = vector.shape_cast %224 : vector<8xf32> to vector<8x1xf32>
      %cst_87 = arith.constant 1.280000e+02 : f32
      %226 = vector.broadcast %cst_87 : f32 to vector<8x1xf32>
      %227 = arith.divf %225, %226 : vector<8x1xf32>
      %228 = vector.broadcast %220 : vector<8x1xf32> to vector<8x128xf32>
      %229 = arith.subf %210, %228 : vector<8x128xf32>
      %cst_88 = arith.constant 9.99999974E-6 : f32
      %230 = vector.broadcast %cst_88 : f32 to vector<8x1xf32>
      %231 = arith.addf %227, %230 : vector<8x1xf32>
      %232 = math.rsqrt %231 : vector<8x1xf32>
      %233 = vector.broadcast %232 : vector<8x1xf32> to vector<8x128xf32>
      %234 = arith.mulf %229, %233 : vector<8x128xf32>
      %235 = vector.broadcast %215 : vector<1x128xf32> to vector<8x128xf32>
      %236 = arith.mulf %234, %235 : vector<8x128xf32>
      %237 = vector.broadcast %216 : vector<1x128xf32> to vector<8x128xf32>
      %238 = arith.addf %236, %237 : vector<8x128xf32>
      %239 = vector.shape_cast %238 : vector<8x128xf32> to vector<1x8x128xf32>
      %c0_89 = arith.constant 0 : index
      %c0_90 = arith.constant 0 : index
      %c0_91 = arith.constant 0 : index
      %240 = vector.load %arg18[%c0_89, %c0_90, %c0_91] : memref<1x8x128xf32, #tpu.memory_space<vmem>>, vector<1x8x128xf32>
      tpu.vector_store %arg18[%c0_89, %c0_90, %c0_91], %239 {strides = array<i32>} : memref<1x8x128xf32, #tpu.memory_space<vmem>>, vector<1x8x128xf32>,
    } else {
    }
    return
  }
  func.func @transform_0(%arg0: i32, %arg1: i32) -> (i32, i32, i32) {
    %c0_i32 = arith.constant 0 : i32
    %c0_i32_0 = arith.constant 0 : i32
    %c0_i32_1 = arith.constant 0 : i32
    return %arg0, %c0_i32, %c0_i32_0 : i32, i32, i32
  }
  func.func @transform_1(%arg0: i32, %arg1: i32) -> (i32, i32) {
    %c0_i32 = arith.constant 0 : i32
    %c0_i32_0 = arith.constant 0 : i32
    %c0_i32_1 = arith.constant 0 : i32
    return %c0_i32, %c0_i32_0 : i32, i32
  }
  func.func @transform_2(%arg0: i32, %arg1: i32) -> (i32, i32, i32) {
    %c0_i32 = arith.constant 0 : i32
    %c0_i32_0 = arith.constant 0 : i32
    %c0_i32_1 = arith.constant 0 : i32
    return %arg1, %c0_i32, %c0_i32_0 : i32, i32, i32
  }
  func.func @transform_3(%arg0: i32, %arg1: i32) -> (i32, i32, i32) {
    %c0_i32 = arith.constant 0 : i32
    %c0_i32_0 = arith.constant 0 : i32
    %c0_i32_1 = arith.constant 0 : i32
    return %arg1, %c0_i32, %c0_i32_0 : i32, i32, i32
  }
  func.func @transform_4(%arg0: i32, %arg1: i32) -> (i32, i32, i32) {
    %c0_i32 = arith.constant 0 : i32
    %c0_i32_0 = arith.constant 0 : i32
    %c0_i32_1 = arith.constant 0 : i32
    return %arg1, %c0_i32, %c0_i32_0 : i32, i32, i32
  }
  func.func @transform_5(%arg0: i32, %arg1: i32) -> (i32, i32, i32) {
    %c0_i32 = arith.constant 0 : i32
    %c0_i32_0 = arith.constant 0 : i32
    %c0_i32_1 = arith.constant 0 : i32
    return %arg1, %c0_i32, %c0_i32_0 : i32, i32, i32
  }
  func.func @transform_6(%arg0: i32, %arg1: i32) -> (i32, i32, i32) {
    %c0_i32 = arith.constant 0 : i32
    %c0_i32_0 = arith.constant 0 : i32
    %c0_i32_1 = arith.constant 0 : i32
    return %arg1, %c0_i32, %c0_i32_0 : i32, i32, i32
  }
  func.func @transform_7(%arg0: i32, %arg1: i32) -> (i32, i32, i32) {
    %c0_i32 = arith.constant 0 : i32
    %c0_i32_0 = arith.constant 0 : i32
    %c0_i32_1 = arith.constant 0 : i32
    return %arg1, %c0_i32, %c0_i32_0 : i32, i32, i32
  }
  func.func @transform_8(%arg0: i32, %arg1: i32) -> (i32, i32, i32) {
    %c0_i32 = arith.constant 0 : i32
    %c0_i32_0 = arith.constant 0 : i32
    %c0_i32_1 = arith.constant 0 : i32
    return %arg1, %c0_i32, %c0_i32_0 : i32, i32, i32
  }
  func.func @transform_9(%arg0: i32, %arg1: i32) -> (i32, i32, i32) {
    %c0_i32 = arith.constant 0 : i32
    %c0_i32_0 = arith.constant 0 : i32
    %c0_i32_1 = arith.constant 0 : i32
    return %arg1, %c0_i32, %c0_i32_0 : i32, i32, i32
  }
  func.func @transform_10(%arg0: i32, %arg1: i32) -> (i32, i32, i32) {
    %c0_i32 = arith.constant 0 : i32
    %c0_i32_0 = arith.constant 0 : i32
    %c0_i32_1 = arith.constant 0 : i32
    return %arg1, %c0_i32, %c0_i32_0 : i32, i32, i32
  }
  func.func @transform_11(%arg0: i32, %arg1: i32) -> (i32, i32, i32) {
    %c0_i32 = arith.constant 0 : i32
    %c0_i32_0 = arith.constant 0 : i32
    %c0_i32_1 = arith.constant 0 : i32
    return %arg1, %c0_i32, %c0_i32_0 : i32, i32, i32
  }
  func.func @transform_12(%arg0: i32, %arg1: i32) -> (i32, i32, i32) {
    %c0_i32 = arith.constant 0 : i32
    %c0_i32_0 = arith.constant 0 : i32
    %c0_i32_1 = arith.constant 0 : i32
    return %arg1, %c0_i32, %c0_i32_0 : i32, i32, i32
  }
  func.func @transform_13(%arg0: i32, %arg1: i32) -> (i32, i32, i32) {
    %c0_i32 = arith.constant 0 : i32
    %c0_i32_0 = arith.constant 0 : i32
    %c0_i32_1 = arith.constant 0 : i32
    return %arg1, %c0_i32, %c0_i32_0 : i32, i32, i32
  }
  func.func @transform_14(%arg0: i32, %arg1: i32) -> (i32, i32) {
    %c0_i32 = arith.constant 0 : i32
    %c0_i32_0 = arith.constant 0 : i32
    %c0_i32_1 = arith.constant 0 : i32
    return %c0_i32, %c0_i32_0 : i32, i32
  }
  func.func @transform_15(%arg0: i32, %arg1: i32) -> (i32, i32) {
    %c0_i32 = arith.constant 0 : i32
    %c0_i32_0 = arith.constant 0 : i32
    %c0_i32_1 = arith.constant 0 : i32
    return %c0_i32, %c0_i32_0 : i32, i32
  }
  func.func @transform_16(%arg0: i32, %arg1: i32) -> (i32, i32, i32) {
    %c0_i32 = arith.constant 0 : i32
    %c0_i32_0 = arith.constant 0 : i32
    %c0_i32_1 = arith.constant 0 : i32
    return %arg0, %c0_i32, %c0_i32_0 : i32, i32, i32
  }
}

</mosaic_0001>

<llo_original>
// kernel: pico_gpt_forward.1
$region0: #{pico_gpt_forward.1}
  #allocation0 [shape = 'u32[]', space=smem, size = 0x4, offset = 0x4, fixed_abs, tag = 'smem constant byte address 0x4 - core index']
  #allocation1 [shape = 'u32[144,128]{1,0:T(1,128)}', space=vmem, size = 0x12000, scoped, tag = 'internal scratch']
  #allocation2 [shape = 'f32[8,128]{1,0:T(8,128)}', space=vmem, size = 0x1000, scoped, tag = 'scratch operand']
  %s0 = inlined_call_operand.vmem [shape: f32[2,8,128], index: 0, kind: input, shape index: {}]
  %s1 = inlined_call_operand.vmem [shape: f32[8,128], index: 1, kind: input, shape index: {}]
  %s2 = inlined_call_operand.vmem [shape: f32[2,1,128], index: 2, kind: input, shape index: {}]
  %s3 = inlined_call_operand.vmem [shape: f32[2,1,128], index: 3, kind: input, shape index: {}]
  %s4 = inlined_call_operand.vmem [shape: bf16[2,128,384], index: 4, kind: input, shape index: {}]
  %s5 = inlined_call_operand.vmem [shape: f32[2,1,384], index: 5, kind: input, shape index: {}]
  %s6 = inlined_call_operand.vmem [shape: bf16[2,128,128], index: 6, kind: input, shape index: {}]
  %s7 = inlined_call_operand.vmem [shape: f32[2,1,128], index: 7, kind: input, shape index: {}]
  %s8 = inlined_call_operand.vmem [shape: f32[2,1,128], index: 8, kind: input, shape index: {}]
  %s9 = inlined_call_operand.vmem [shape: f32[2,1,128], index: 9, kind: input, shape index: {}]
  %s10 = inlined_call_operand.vmem [shape: bf16[2,128,512], index: 10, kind: input, shape index: {}]
  %s11 = inlined_call_operand.vmem [shape: f32[2,1,512], index: 11, kind: input, shape index: {}]
  %s12 = inlined_call_operand.vmem [shape: bf16[2,512,128], index: 12, kind: input, shape index: {}]
  %s13 = inlined_call_operand.vmem [shape: f32[2,1,128], index: 13, kind: input, shape index: {}]
  %s14 = inlined_call_operand.vmem [shape: f32[1,128], index: 14, kind: input, shape index: {}]
  %s15 = inlined_call_operand.vmem [shape: f32[1,128], index: 15, kind: input, shape index: {}]
  %s16 = inlined_call_operand.hbm [shape: f32[2,8,128], index: 16, kind: output, shape index: {}]
  %s17 = sld [smem:[#allocation0]]
  $region105: #{pico_gpt_forward.1} parent=0
    _
  %s19 = ssub.s32 1, %s17
  %s20 = scalar_select 0, %s19, %s17
  $region1: #{pico_gpt_forward.1} parent=0
    #allocation3 [shape = 'u8[8192]{0}', space=vmem, size = 0x2000, scoped, tag = 'output window, operand 0']
    #allocation4 [shape = 's32[2]{0}', space=sflag, size = 0x8, scoped, tag = 'scoped memory for pico_gpt_forward.1']
    %21 = vsyncpa [#allocation4], 0
    %s22 = scalar_lea.sflag [#allocation4], 1
    %23 = vsyncpa %s22, 0
    loop: start=0, step=1, limit=6
    $region2: #{pico_gpt_forward.1} parent=1 // loop_pre_header
      _
    $region3: #{pico_gpt_forward.1} parent=1 // loop_header
      %s25 = sphi 0, %s29
      %p26 = scmp.ge.s32.totalorder %s25, 6
      %s32 = sphi 0, %s44
      %s33 = sphi 0, %s40
      %s34 = sphi 0, %s32
      %s35 = sphi 0, %s33
      %s36 = sphi 0, %s34
      %s37 = sphi 0, %s35
      %s47 = sphi 0, %s49
      %s50 = sphi 0, %s47
      %s51 = sphi 0, %s50
      %s67 = sphi 0, %s51
      %s71 = sphi 0, %s71
      %s73 = sphi 0, %s71
      %s74 = sphi 0, %s73
      %s88 = sphi 0, %s74
      %s94 = sphi 0, %s96
      %s97 = sphi 0, %s94
      %s98 = sphi 0, %s97
      %s114 = sphi 0, %s98
      %s120 = sphi 0, %s122
      %s123 = sphi 0, %s120
      %s124 = sphi 0, %s123
      %s140 = sphi 0, %s124
      %s146 = sphi 0, %s148
      %s149 = sphi 0, %s146
      %s150 = sphi 0, %s149
      %s166 = sphi 0, %s150
      %s172 = sphi 0, %s174
      %s175 = sphi 0, %s172
      %s176 = sphi 0, %s175
      %s192 = sphi 0, %s176
      %s198 = sphi 0, %s200
      %s201 = sphi 0, %s198
      %s202 = sphi 0, %s201
      %s218 = sphi 0, %s202
      %s224 = sphi 0, %s226
      %s227 = sphi 0, %s224
      %s228 = sphi 0, %s227
      %s244 = sphi 0, %s228
      %s250 = sphi 0, %s252
      %s253 = sphi 0, %s250
      %s254 = sphi 0, %s253
      %s270 = sphi 0, %s254
      %s276 = sphi 0, %s278
      %s279 = sphi 0, %s276
      %s280 = sphi 0, %s279
      %s296 = sphi 0, %s280
      %s302 = sphi 0, %s304
      %s305 = sphi 0, %s302
      %s306 = sphi 0, %s305
      %s322 = sphi 0, %s306
      %s328 = sphi 0, %s330
      %s331 = sphi 0, %s328
      %s332 = sphi 0, %s331
      %s348 = sphi 0, %s332
      %s354 = sphi 0, %s356
      %s357 = sphi 0, %s354
      %s358 = sphi 0, %s357
      %s374 = sphi 0, %s358
      %s380 = sphi 0, %s382
      %s383 = sphi 0, %s380
      %s384 = sphi 0, %s383
      %s400 = sphi 0, %s384
      %s404 = sphi 0, %s404
      %s406 = sphi 0, %s404
      %s407 = sphi 0, %s406
      %s421 = sphi 0, %s407
      %s425 = sphi 0, %s425
      %s427 = sphi 0, %s425
      %s428 = sphi 0, %s427
      %s442 = sphi 0, %s428
      %s448 = sphi 0, %s450
      %s451 = sphi 0, %s448
      %s452 = sphi 0, %s451
      %s468 = sphi 0, %s452
    $region4: #{pico_gpt_forward.1} parent=1 // loop_header_branch
      %28 = sbr.rel (%p26) target = $region8
    $region5: #{pico_gpt_forward.1} parent=1 // loop_body
      %s30 = ssub.s32 %s25, 1
      %s31 = ssub.s32 %s25, 2
      %s38 = sadd.s32 1, %s33
      %p39 = scmp.ge.s32.totalorder %s38, 2
      %s40 = scalar_select %p39, 0, %s38
      %s41 = sadd.s32 1, %s32
      %s42 = scalar_select %p39, %s41, %s32
      %p43 = scmp.ge.s32.totalorder %s42, 2
      %s44 = scalar_select %p43, 0, %s42
      %s45 = ssub.s32 %s32, %s44
      %p46 = scmp.eq.s32.totalorder %s45, 0
      %s48 = sadd.s32 %s47, 1
      %s49 = scalar_select %p46, %s47, %s48
      %p52 = pneg %p46
      %p53 = scmp.eq.s32.totalorder %s25, 3
      %p54 = por %p52, %p53
      %p55 = scmp.ne.s32.totalorder %s47, %s50
      %p56 = scmp.eq.s32.totalorder %s25, 0
      %p57 = por %p55, %p56
      %p58 = scmp.ne.s32.totalorder %s47, %s50
      %p59 = scmp.eq.s32.totalorder %s30, 3
      %p60 = por %p58, %p59
      %p61 = scmp.ne.s32.totalorder %s50, %s51
      %p62 = scmp.eq.s32.totalorder %s30, 0
      %p63 = por %p61, %p62
      %p64 = scmp.ne.s32.totalorder %s50, %s51
      %p65 = scmp.eq.s32.totalorder %s31, 3
      %p66 = por %p64, %p65
      %p68 = scmp.ne.s32.totalorder %s51, %s67
      %p69 = scmp.eq.s32.totalorder %s31, 0
      %p70 = por %p68, %p69
      %s72 = sadd.s32 %s71, 1
      %p75 = scmp.eq.s32.totalorder %s25, 3
      %p76 = scmp.ne.s32.totalorder %s71, %s73
      %p77 = scmp.eq.s32.totalorder %s25, 0
      %p78 = por %p76, %p77
      %p79 = scmp.ne.s32.totalorder %s71, %s73
      %p80 = scmp.eq.s32.totalorder %s30, 3
      %p81 = por %p79, %p80
      %p82 = scmp.ne.s32.totalorder %s73, %s74
      %p83 = scmp.eq.s32.totalorder %s30, 0
      %p84 = por %p82, %p83
      %p85 = scmp.ne.s32.totalorder %s73, %s74
      %p86 = scmp.eq.s32.totalorder %s31, 3
      %p87 = por %p85, %p86
      %p89 = scmp.ne.s32.totalorder %s74, %s88
      %p90 = scmp.eq.s32.totalorder %s31, 0
      %p91 = por %p89, %p90
      %s92 = ssub.s32 %s33, %s40
      %p93 = scmp.eq.s32.totalorder %s92, 0
      %s95 = sadd.s32 %s94, 1
      %s96 = scalar_select %p93, %s94, %s95
      %p99 = pneg %p93
      %p100 = scmp.eq.s32.totalorder %s25, 3
      %p101 = por %p99, %p100
      %p102 = scmp.ne.s32.totalorder %s94, %s97
      %p103 = scmp.eq.s32.totalorder %s25, 0
      %p104 = por %p102, %p103
      %p105 = scmp.ne.s32.totalorder %s94, %s97
      %p106 = scmp.eq.s32.totalorder %s30, 3
      %p107 = por %p105, %p106
      %p108 = scmp.ne.s32.totalorder %s97, %s98
      %p109 = scmp.eq.s32.totalorder %s30, 0
      %p110 = por %p108, %p109
      %p111 = scmp.ne.s32.totalorder %s97, %s98
      %p112 = scmp.eq.s32.totalorder %s31, 3
      %p113 = por %p111, %p112
      %p115 = scmp.ne.s32.totalorder %s98, %s114
      %p116 = scmp.eq.s32.totalorder %s31, 0
      %p117 = por %p115, %p116
      %s118 = ssub.s32 %s33, %s40
      %p119 = scmp.eq.s32.totalorder %s118, 0
      %s121 = sadd.s32 %s120, 1
      %s122 = scalar_select %p119, %s120, %s121
      %p125 = pneg %p119
      %p126 = scmp.eq.s32.totalorder %s25, 3
      %p127 = por %p125, %p126
      %p128 = scmp.ne.s32.totalorder %s120, %s123
      %p129 = scmp.eq.s32.totalorder %s25, 0
      %p130 = por %p128, %p129
      %p131 = scmp.ne.s32.totalorder %s120, %s123
      %p132 = scmp.eq.s32.totalorder %s30, 3
      %p133 = por %p131, %p132
      %p134 = scmp.ne.s32.totalorder %s123, %s124
      %p135 = scmp.eq.s32.totalorder %s30, 0
      %p136 = por %p134, %p135
      %p137 = scmp.ne.s32.totalorder %s123, %s124
      %p138 = scmp.eq.s32.totalorder %s31, 3
      %p139 = por %p137, %p138
      %p141 = scmp.ne.s32.totalorder %s124, %s140
      %p142 = scmp.eq.s32.totalorder %s31, 0
      %p143 = por %p141, %p142
      %s144 = ssub.s32 %s33, %s40
      %p145 = scmp.eq.s32.totalorder %s144, 0
      %s147 = sadd.s32 %s146, 1
      %s148 = scalar_select %p145, %s146, %s147
      %p151 = pneg %p145
      %p152 = scmp.eq.s32.totalorder %s25, 3
      %p153 = por %p151, %p152
      %p154 = scmp.ne.s32.totalorder %s146, %s149
      %p155 = scmp.eq.s32.totalorder %s25, 0
      %p156 = por %p154, %p155
      %p157 = scmp.ne.s32.totalorder %s146, %s149
      %p158 = scmp.eq.s32.totalorder %s30, 3
      %p159 = por %p157, %p158
      %p160 = scmp.ne.s32.totalorder %s149, %s150
      %p161 = scmp.eq.s32.totalorder %s30, 0
      %p162 = por %p160, %p161
      %p163 = scmp.ne.s32.totalorder %s149, %s150
      %p164 = scmp.eq.s32.totalorder %s31, 3
      %p165 = por %p163, %p164
      %p167 = scmp.ne.s32.totalorder %s150, %s166
      %p168 = scmp.eq.s32.totalorder %s31, 0
      %p169 = por %p167, %p168
      %s170 = ssub.s32 %s33, %s40
      %p171 = scmp.eq.s32.totalorder %s170, 0
      %s173 = sadd.s32 %s172, 1
      %s174 = scalar_select %p171, %s172, %s173
      %p177 = pneg %p171
      %p178 = scmp.eq.s32.totalorder %s25, 3
      %p179 = por %p177, %p178
      %p180 = scmp.ne.s32.totalorder %s172, %s175
      %p181 = scmp.eq.s32.totalorder %s25, 0
      %p182 = por %p180, %p181
      %p183 = scmp.ne.s32.totalorder %s172, %s175
      %p184 = scmp.eq.s32.totalorder %s30, 3
      %p185 = por %p183, %p184
      %p186 = scmp.ne.s32.totalorder %s175, %s176
      %p187 = scmp.eq.s32.totalorder %s30, 0
      %p188 = por %p186, %p187
      %p189 = scmp.ne.s32.totalorder %s175, %s176
      %p190 = scmp.eq.s32.totalorder %s31, 3
      %p191 = por %p189, %p190
      %p193 = scmp.ne.s32.totalorder %s176, %s192
      %p194 = scmp.eq.s32.totalorder %s31, 0
      %p195 = por %p193, %p194
      %s196 = ssub.s32 %s33, %s40
      %p197 = scmp.eq.s32.totalorder %s196, 0
      %s199 = sadd.s32 %s198, 1
      %s200 = scalar_select %p197, %s198, %s199
      %p203 = pneg %p197
      %p204 = scmp.eq.s32.totalorder %s25, 3
      %p205 = por %p203, %p204
      %p206 = scmp.ne.s32.totalorder %s198, %s201
      %p207 = scmp.eq.s32.totalorder %s25, 0
      %p208 = por %p206, %p207
      %p209 = scmp.ne.s32.totalorder %s198, %s201
      %p210 = scmp.eq.s32.totalorder %s30, 3
      %p211 = por %p209, %p210
      %p212 = scmp.ne.s32.totalorder %s201, %s202
      %p213 = scmp.eq.s32.totalorder %s30, 0
      %p214 = por %p212, %p213
      %p215 = scmp.ne.s32.totalorder %s201, %s202
      %p216 = scmp.eq.s32.totalorder %s31, 3
      %p217 = por %p215, %p216
      %p219 = scmp.ne.s32.totalorder %s202, %s218
      %p220 = scmp.eq.s32.totalorder %s31, 0
      %p221 = por %p219, %p220
      %s222 = ssub.s32 %s33, %s40
      %p223 = scmp.eq.s32.totalorder %s222, 0
      %s225 = sadd.s32 %s224, 1
      %s226 = scalar_select %p223, %s224, %s225
      %p229 = pneg %p223
      %p230 = scmp.eq.s32.totalorder %s25, 3
      %p231 = por %p229, %p230
      %p232 = scmp.ne.s32.totalorder %s224, %s227
      %p233 = scmp.eq.s32.totalorder %s25, 0
      %p234 = por %p232, %p233
      %p235 = scmp.ne.s32.totalorder %s224, %s227
      %p236 = scmp.eq.s32.totalorder %s30, 3
      %p237 = por %p235, %p236
      %p238 = scmp.ne.s32.totalorder %s227, %s228
      %p239 = scmp.eq.s32.totalorder %s30, 0
      %p240 = por %p238, %p239
      %p241 = scmp.ne.s32.totalorder %s227, %s228
      %p242 = scmp.eq.s32.totalorder %s31, 3
      %p243 = por %p241, %p242
      %p245 = scmp.ne.s32.totalorder %s228, %s244
      %p246 = scmp.eq.s32.totalorder %s31, 0
      %p247 = por %p245, %p246
      %s248 = ssub.s32 %s33, %s40
      %p249 = scmp.eq.s32.totalorder %s248, 0
      %s251 = sadd.s32 %s250, 1
      %s252 = scalar_select %p249, %s250, %s251
      %p255 = pneg %p249
      %p256 = scmp.eq.s32.totalorder %s25, 3
      %p257 = por %p255, %p256
      %p258 = scmp.ne.s32.totalorder %s250, %s253
      %p259 = scmp.eq.s32.totalorder %s25, 0
      %p260 = por %p258, %p259
      %p261 = scmp.ne.s32.totalorder %s250, %s253
      %p262 = scmp.eq.s32.totalorder %s30, 3
      %p263 = por %p261, %p262
      %p264 = scmp.ne.s32.totalorder %s253, %s254
      %p265 = scmp.eq.s32.totalorder %s30, 0
      %p266 = por %p264, %p265
      %p267 = scmp.ne.s32.totalorder %s253, %s254
      %p268 = scmp.eq.s32.totalorder %s31, 3
      %p269 = por %p267, %p268
      %p271 = scmp.ne.s32.totalorder %s254, %s270
      %p272 = scmp.eq.s32.totalorder %s31, 0
      %p273 = por %p271, %p272
      %s274 = ssub.s32 %s33, %s40
      %p275 = scmp.eq.s32.totalorder %s274, 0
      %s277 = sadd.s32 %s276, 1
      %s278 = scalar_select %p275, %s276, %s277
      %p281 = pneg %p275
      %p282 = scmp.eq.s32.totalorder %s25, 3
      %p283 = por %p281, %p282
      %p284 = scmp.ne.s32.totalorder %s276, %s279
      %p285 = scmp.eq.s32.totalorder %s25, 0
      %p286 = por %p284, %p285
      %p287 = scmp.ne.s32.totalorder %s276, %s279
      %p288 = scmp.eq.s32.totalorder %s30, 3
      %p289 = por %p287, %p288
      %p290 = scmp.ne.s32.totalorder %s279, %s280
      %p291 = scmp.eq.s32.totalorder %s30, 0
      %p292 = por %p290, %p291
      %p293 = scmp.ne.s32.totalorder %s279, %s280
      %p294 = scmp.eq.s32.totalorder %s31, 3
      %p295 = por %p293, %p294
      %p297 = scmp.ne.s32.totalorder %s280, %s296
      %p298 = scmp.eq.s32.totalorder %s31, 0
      %p299 = por %p297, %p298
      %s300 = ssub.s32 %s33, %s40
      %p301 = scmp.eq.s32.totalorder %s300, 0
      %s303 = sadd.s32 %s302, 1
      %s304 = scalar_select %p301, %s302, %s303
      %p307 = pneg %p301
      %p308 = scmp.eq.s32.totalorder %s25, 3
      %p309 = por %p307, %p308
      %p310 = scmp.ne.s32.totalorder %s302, %s305
      %p311 = scmp.eq.s32.totalorder %s25, 0
      %p312 = por %p310, %p311
      %p313 = scmp.ne.s32.totalorder %s302, %s305
      %p314 = scmp.eq.s32.totalorder %s30, 3
      %p315 = por %p313, %p314
      %p316 = scmp.ne.s32.totalorder %s305, %s306
      %p317 = scmp.eq.s32.totalorder %s30, 0
      %p318 = por %p316, %p317
      %p319 = scmp.ne.s32.totalorder %s305, %s306
      %p320 = scmp.eq.s32.totalorder %s31, 3
      %p321 = por %p319, %p320
      %p323 = scmp.ne.s32.totalorder %s306, %s322
      %p324 = scmp.eq.s32.totalorder %s31, 0
      %p325 = por %p323, %p324
      %s326 = ssub.s32 %s33, %s40
      %p327 = scmp.eq.s32.totalorder %s326, 0
      %s329 = sadd.s32 %s328, 1
      %s330 = scalar_select %p327, %s328, %s329
      %p333 = pneg %p327
      %p334 = scmp.eq.s32.totalorder %s25, 3
      %p335 = por %p333, %p334
      %p336 = scmp.ne.s32.totalorder %s328, %s331
      %p337 = scmp.eq.s32.totalorder %s25, 0
      %p338 = por %p336, %p337
      %p339 = scmp.ne.s32.totalorder %s328, %s331
      %p340 = scmp.eq.s32.totalorder %s30, 3
      %p341 = por %p339, %p340
      %p342 = scmp.ne.s32.totalorder %s331, %s332
      %p343 = scmp.eq.s32.totalorder %s30, 0
      %p344 = por %p342, %p343
      %p345 = scmp.ne.s32.totalorder %s331, %s332
      %p346 = scmp.eq.s32.totalorder %s31, 3
      %p347 = por %p345, %p346
      %p349 = scmp.ne.s32.totalorder %s332, %s348
      %p350 = scmp.eq.s32.totalorder %s31, 0
      %p351 = por %p349, %p350
      %s352 = ssub.s32 %s33, %s40
      %p353 = scmp.eq.s32.totalorder %s352, 0
      %s355 = sadd.s32 %s354, 1
      %s356 = scalar_select %p353, %s354, %s355
      %p359 = pneg %p353
      %p360 = scmp.eq.s32.totalorder %s25, 3
      %p361 = por %p359, %p360
      %p362 = scmp.ne.s32.totalorder %s354, %s357
      %p363 = scmp.eq.s32.totalorder %s25, 0
      %p364 = por %p362, %p363
      %p365 = scmp.ne.s32.totalorder %s354, %s357
      %p366 = scmp.eq.s32.totalorder %s30, 3
      %p367 = por %p365, %p366
      %p368 = scmp.ne.s32.totalorder %s357, %s358
      %p369 = scmp.eq.s32.totalorder %s30, 0
      %p370 = por %p368, %p369
      %p371 = scmp.ne.s32.totalorder %s357, %s358
      %p372 = scmp.eq.s32.totalorder %s31, 3
      %p373 = por %p371, %p372
      %p375 = scmp.ne.s32.totalorder %s358, %s374
      %p376 = scmp.eq.s32.totalorder %s31, 0
      %p377 = por %p375, %p376
      %s378 = ssub.s32 %s33, %s40
      %p379 = scmp.eq.s32.totalorder %s378, 0
      %s381 = sadd.s32 %s380, 1
      %s382 = scalar_select %p379, %s380, %s381
      %p385 = pneg %p379
      %p386 = scmp.eq.s32.totalorder %s25, 3
      %p387 = por %p385, %p386
      %p388 = scmp.ne.s32.totalorder %s380, %s383
      %p389 = scmp.eq.s32.totalorder %s25, 0
      %p390 = por %p388, %p389
      %p391 = scmp.ne.s32.totalorder %s380, %s383
      %p392 = scmp.eq.s32.totalorder %s30, 3
      %p393 = por %p391, %p392
      %p394 = scmp.ne.s32.totalorder %s383, %s384
      %p395 = scmp.eq.s32.totalorder %s30, 0
      %p396 = por %p394, %p395
      %p397 = scmp.ne.s32.totalorder %s383, %s384
      %p398 = scmp.eq.s32.totalorder %s31, 3
      %p399 = por %p397, %p398
      %p401 = scmp.ne.s32.totalorder %s384, %s400
      %p402 = scmp.eq.s32.totalorder %s31, 0
      %p403 = por %p401, %p402
      %s405 = sadd.s32 %s404, 1
      %p408 = scmp.eq.s32.totalorder %s25, 3
      %p409 = scmp.ne.s32.totalorder %s404, %s406
      %p410 = scmp.eq.s32.totalorder %s25, 0
      %p411 = por %p409, %p410
      %p412 = scmp.ne.s32.totalorder %s404, %s406
      %p413 = scmp.eq.s32.totalorder %s30, 3
      %p414 = por %p412, %p413
      %p415 = scmp.ne.s32.totalorder %s406, %s407
      %p416 = scmp.eq.s32.totalorder %s30, 0
      %p417 = por %p415, %p416
      %p418 = scmp.ne.s32.totalorder %s406, %s407
      %p419 = scmp.eq.s32.totalorder %s31, 3
      %p420 = por %p418, %p419
      %p422 = scmp.ne.s32.totalorder %s407, %s421
      %p423 = scmp.eq.s32.totalorder %s31, 0
      %p424 = por %p422, %p423
      %s426 = sadd.s32 %s425, 1
      %p429 = scmp.eq.s32.totalorder %s25, 3
      %p430 = scmp.ne.s32.totalorder %s425, %s427
      %p431 = scmp.eq.s32.totalorder %s25, 0
      %p432 = por %p430, %p431
      %p433 = scmp.ne.s32.totalorder %s425, %s427
      %p434 = scmp.eq.s32.totalorder %s30, 3
      %p435 = por %p433, %p434
      %p436 = scmp.ne.s32.totalorder %s427, %s428
      %p437 = scmp.eq.s32.totalorder %s30, 0
      %p438 = por %p436, %p437
      %p439 = scmp.ne.s32.totalorder %s427, %s428
      %p440 = scmp.eq.s32.totalorder %s31, 3
      %p441 = por %p439, %p440
      %p443 = scmp.ne.s32.totalorder %s428, %s442
      %p444 = scmp.eq.s32.totalorder %s31, 0
      %p445 = por %p443, %p444
      %s446 = ssub.s32 %s32, %s44
      %p447 = scmp.eq.s32.totalorder %s446, 0
      %s449 = sadd.s32 %s448, 1
      %s450 = scalar_select %p447, %s448, %s449
      %p453 = pneg %p447
      %p454 = scmp.eq.s32.totalorder %s25, 3
      %p455 = por %p453, %p454
      %p456 = scmp.ne.s32.totalorder %s448, %s451
      %p457 = scmp.eq.s32.totalorder %s25, 0
      %p458 = por %p456, %p457
      %p459 = scmp.ne.s32.totalorder %s448, %s451
      %p460 = scmp.eq.s32.totalorder %s30, 3
      %p461 = por %p459, %p460
      %p462 = scmp.ne.s32.totalorder %s451, %s452
      %p463 = scmp.eq.s32.totalorder %s30, 0
      %p464 = por %p462, %p463
      %p465 = scmp.ne.s32.totalorder %s451, %s452
      %p466 = scmp.eq.s32.totalorder %s31, 3
      %p467 = por %p465, %p466
      %p469 = scmp.ne.s32.totalorder %s452, %s468
      %p470 = scmp.eq.s32.totalorder %s31, 0
      %p471 = por %p469, %p470
      %p472 = scmp.le.s32.totalorder 1, %s25
      %p473 = scmp.lt.s32.totalorder %s25, 5
      %p474 = pnand %p472, %p473
      %p475 = pneg %p474
      // Predicated region
      $region9: #{pico_gpt_forward.1} parent=5 // pred_check
        _
      $region10: #{pico_gpt_forward.1} parent=5 // pred_check_branch
        %477 = sbr.rel (%p474) target = $region12
      $region11: #{pico_gpt_forward.1} parent=5 // pred_region
        %s478 = ssub.s32 %s25, 1
        // Predicated region
        $region13: #{pico_gpt_forward.1} parent=11 // pred_check
          %p479 = pneg %p84
        $region14: #{pico_gpt_forward.1} parent=11 // pred_check_branch
          %481 = sbr.rel (%p479) target = $region16
        $region15: #{pico_gpt_forward.1} parent=11 // pred_region
          _
        $region16: #{pico_gpt_forward.1} parent=11 // pred_fallthru
          _
        // Predicated region
        $region17: #{pico_gpt_forward.1} parent=11 // pred_check
          %p482 = pneg %p417
        $region18: #{pico_gpt_forward.1} parent=11 // pred_check_branch
          %484 = sbr.rel (%p482) target = $region20
        $region19: #{pico_gpt_forward.1} parent=11 // pred_region
          _
        $region20: #{pico_gpt_forward.1} parent=11 // pred_fallthru
          _
        // Predicated region
        $region21: #{pico_gpt_forward.1} parent=11 // pred_check
          %p485 = pneg %p438
        $region22: #{pico_gpt_forward.1} parent=11 // pred_check_branch
          %487 = sbr.rel (%p485) target = $region24
        $region23: #{pico_gpt_forward.1} parent=11 // pred_region
          _
        $region24: #{pico_gpt_forward.1} parent=11 // pred_fallthru
          _
      $region12: #{pico_gpt_forward.1} parent=5 // pred_fallthru
        _
      %p488 = scmp.lt.s32.totalorder %s25, 4
      // Predicated region
      $region25: #{pico_gpt_forward.1} parent=5 // pred_check
        %p489 = pneg %p488
      $region26: #{pico_gpt_forward.1} parent=5 // pred_check_branch
        %491 = sbr.rel (%p489) target = $region28
      $region27: #{pico_gpt_forward.1} parent=5 // pred_region
        // Predicated region
        $region29: #{pico_gpt_forward.1} parent=27 // pred_check
          %p492 = pneg %p57
        $region30: #{pico_gpt_forward.1} parent=27 // pred_check_branch
          %494 = sbr.rel (%p492) target = $region32
        $region31: #{pico_gpt_forward.1} parent=27 // pred_region
          %p495 = scmp.lt.s32.totalorder %s32, 1
          %s496 = scalar_select %p495, %s32, 1
          %s497 = smul.addr %s496, 8
          %s498 = scalar_lea.vmem %s0, %s497
        $region32: #{pico_gpt_forward.1} parent=27 // pred_fallthru
          _
        // Predicated region
        $region33: #{pico_gpt_forward.1} parent=27 // pred_check
          %p499 = pneg %p104
        $region34: #{pico_gpt_forward.1} parent=27 // pred_check_branch
          %501 = sbr.rel (%p499) target = $region36
        $region35: #{pico_gpt_forward.1} parent=27 // pred_region
          %p502 = scmp.lt.s32.totalorder %s33, 1
          %s503 = scalar_select %p502, %s33, 1
          %s504 = scalar_lea.vmem %s2, %s503
        $region36: #{pico_gpt_forward.1} parent=27 // pred_fallthru
          _
        // Predicated region
        $region37: #{pico_gpt_forward.1} parent=27 // pred_check
          %p505 = pneg %p130
        $region38: #{pico_gpt_forward.1} parent=27 // pred_check_branch
          %507 = sbr.rel (%p505) target = $region40
        $region39: #{pico_gpt_forward.1} parent=27 // pred_region
          %p508 = scmp.lt.s32.totalorder %s33, 1
          %s509 = scalar_select %p508, %s33, 1
          %s510 = scalar_lea.vmem %s3, %s509
        $region40: #{pico_gpt_forward.1} parent=27 // pred_fallthru
          _
        // Predicated region
        $region41: #{pico_gpt_forward.1} parent=27 // pred_check
          %p511 = pneg %p156
        $region42: #{pico_gpt_forward.1} parent=27 // pred_check_branch
          %513 = sbr.rel (%p511) target = $region44
        $region43: #{pico_gpt_forward.1} parent=27 // pred_region
          %p514 = scmp.lt.s32.totalorder %s33, 1
          %s515 = scalar_select %p514, %s33, 1
          %s516 = smul.addr %s515, 48
          %s517 = smul.addr %s516, 4
          %s518 = scalar_lea.vmem %s4, %s517
        $region44: #{pico_gpt_forward.1} parent=27 // pred_fallthru
          _
        // Predicated region
        $region45: #{pico_gpt_forward.1} parent=27 // pred_check
          %p519 = pneg %p182
        $region46: #{pico_gpt_forward.1} parent=27 // pred_check_branch
          %521 = sbr.rel (%p519) target = $region48
        $region47: #{pico_gpt_forward.1} parent=27 // pred_region
          %p522 = scmp.lt.s32.totalorder %s33, 1
          %s523 = scalar_select %p522, %s33, 1
          %s524 = smul.addr %s523, 3
          %s525 = scalar_lea.vmem %s5, %s524
        $region48: #{pico_gpt_forward.1} parent=27 // pred_fallthru
          _
        // Predicated region
        $region49: #{pico_gpt_forward.1} parent=27 // pred_check
          %p526 = pneg %p208
        $region50: #{pico_gpt_forward.1} parent=27 // pred_check_branch
          %528 = sbr.rel (%p526) target = $region52
        $region51: #{pico_gpt_forward.1} parent=27 // pred_region
          %p529 = scmp.lt.s32.totalorder %s33, 1
          %s530 = scalar_select %p529, %s33, 1
          %s531 = smul.addr %s530, 16
          %s532 = smul.addr %s531, 4
          %s533 = scalar_lea.vmem %s6, %s532
        $region52: #{pico_gpt_forward.1} parent=27 // pred_fallthru
          _
        // Predicated region
        $region53: #{pico_gpt_forward.1} parent=27 // pred_check
          %p534 = pneg %p234
        $region54: #{pico_gpt_forward.1} parent=27 // pred_check_branch
          %536 = sbr.rel (%p534) target = $region56
        $region55: #{pico_gpt_forward.1} parent=27 // pred_region
          %p537 = scmp.lt.s32.totalorder %s33, 1
          %s538 = scalar_select %p537, %s33, 1
          %s539 = scalar_lea.vmem %s7, %s538
        $region56: #{pico_gpt_forward.1} parent=27 // pred_fallthru
          _
        // Predicated region
        $region57: #{pico_gpt_forward.1} parent=27 // pred_check
          %p540 = pneg %p260
        $region58: #{pico_gpt_forward.1} parent=27 // pred_check_branch
          %542 = sbr.rel (%p540) target = $region60
        $region59: #{pico_gpt_forward.1} parent=27 // pred_region
          %p543 = scmp.lt.s32.totalorder %s33, 1
          %s544 = scalar_select %p543, %s33, 1
          %s545 = scalar_lea.vmem %s8, %s544
        $region60: #{pico_gpt_forward.1} parent=27 // pred_fallthru
          _
        // Predicated region
        $region61: #{pico_gpt_forward.1} parent=27 // pred_check
          %p546 = pneg %p286
        $region62: #{pico_gpt_forward.1} parent=27 // pred_check_branch
          %548 = sbr.rel (%p546) target = $region64
        $region63: #{pico_gpt_forward.1} parent=27 // pred_region
          %p549 = scmp.lt.s32.totalorder %s33, 1
          %s550 = scalar_select %p549, %s33, 1
          %s551 = scalar_lea.vmem %s9, %s550
        $region64: #{pico_gpt_forward.1} parent=27 // pred_fallthru
          _
        // Predicated region
        $region65: #{pico_gpt_forward.1} parent=27 // pred_check
          %p552 = pneg %p312
        $region66: #{pico_gpt_forward.1} parent=27 // pred_check_branch
          %554 = sbr.rel (%p552) target = $region68
        $region67: #{pico_gpt_forward.1} parent=27 // pred_region
          %p555 = scmp.lt.s32.totalorder %s33, 1
          %s556 = scalar_select %p555, %s33, 1
          %s557 = smul.addr %s556, 64
          %s558 = smul.addr %s557, 4
          %s559 = scalar_lea.vmem %s10, %s558
        $region68: #{pico_gpt_forward.1} parent=27 // pred_fallthru
          _
        // Predicated region
        $region69: #{pico_gpt_forward.1} parent=27 // pred_check
          %p560 = pneg %p338
        $region70: #{pico_gpt_forward.1} parent=27 // pred_check_branch
          %562 = sbr.rel (%p560) target = $region72
        $region71: #{pico_gpt_forward.1} parent=27 // pred_region
          %p563 = scmp.lt.s32.totalorder %s33, 1
          %s564 = scalar_select %p563, %s33, 1
          %s565 = smul.addr %s564, 4
          %s566 = scalar_lea.vmem %s11, %s565
        $region72: #{pico_gpt_forward.1} parent=27 // pred_fallthru
          _
        // Predicated region
        $region73: #{pico_gpt_forward.1} parent=27 // pred_check
          %p567 = pneg %p364
        $region74: #{pico_gpt_forward.1} parent=27 // pred_check_branch
          %569 = sbr.rel (%p567) target = $region76
        $region75: #{pico_gpt_forward.1} parent=27 // pred_region
          %p570 = scmp.lt.s32.totalorder %s33, 1
          %s571 = scalar_select %p570, %s33, 1
          %s572 = smul.addr %s571, 64
          %s573 = smul.addr %s572, 4
          %s574 = scalar_lea.vmem %s12, %s573
        $region76: #{pico_gpt_forward.1} parent=27 // pred_fallthru
          _
        // Predicated region
        $region77: #{pico_gpt_forward.1} parent=27 // pred_check
          %p575 = pneg %p390
        $region78: #{pico_gpt_forward.1} parent=27 // pred_check_branch
          %577 = sbr.rel (%p575) target = $region80
        $region79: #{pico_gpt_forward.1} parent=27 // pred_region
          %p578 = scmp.lt.s32.totalorder %s33, 1
          %s579 = scalar_select %p578, %s33, 1
          %s580 = scalar_lea.vmem %s13, %s579
        $region80: #{pico_gpt_forward.1} parent=27 // pred_fallthru
          _
      $region28: #{pico_gpt_forward.1} parent=5 // pred_fallthru
        _
      %p581 = scmp.le.s32.totalorder 1, %s25
      %p582 = scmp.lt.s32.totalorder %s25, 5
      %p583 = pnand %p581, %p582
      %p584 = pneg %p583
      // Predicated region
      $region81: #{pico_gpt_forward.1} parent=5 // pred_check
        _
      $region82: #{pico_gpt_forward.1} parent=5 // pred_check_branch
        %586 = sbr.rel (%p583) target = $region84
      $region83: #{pico_gpt_forward.1} parent=5 // pred_region
        %s587 = ssub.s32 %s25, 1
        %p588 = scmp.lt.s32.totalorder %s34, 1
        %s589 = scalar_select %p588, %s34, 1
        %s590 = smul.addr %s589, 8
        %s591 = scalar_lea.vmem %s0, %s590
        %p592 = pneg %p63
        %p593 = pneg %p60
        %p594 = pneg %p84
        %p595 = pneg %p81
        %p596 = scmp.lt.s32.totalorder %s35, 1
        %s597 = scalar_select %p596, %s35, 1
        %s598 = scalar_lea.vmem %s2, %s597
        %p599 = pneg %p110
        %p600 = pneg %p107
        %p601 = scmp.lt.s32.totalorder %s35, 1
        %s602 = scalar_select %p601, %s35, 1
        %s603 = scalar_lea.vmem %s3, %s602
        %p604 = pneg %p136
        %p605 = pneg %p133
        %p606 = scmp.lt.s32.totalorder %s35, 1
        %s607 = scalar_select %p606, %s35, 1
        %s608 = smul.addr %s607, 48
        %s609 = smul.addr %s608, 4
        %s610 = scalar_lea.vmem %s4, %s609
        %p611 = pneg %p162
        %p612 = pneg %p159
        %p613 = scmp.lt.s32.totalorder %s35, 1
        %s614 = scalar_select %p613, %s35, 1
        %s615 = smul.addr %s614, 3
        %s616 = scalar_lea.vmem %s5, %s615
        %p617 = pneg %p188
        %p618 = pneg %p185
        %p619 = scmp.lt.s32.totalorder %s35, 1
        %s620 = scalar_select %p619, %s35, 1
        %s621 = smul.addr %s620, 16
        %s622 = smul.addr %s621, 4
        %s623 = scalar_lea.vmem %s6, %s622
        %p624 = pneg %p214
        %p625 = pneg %p211
        %p626 = scmp.lt.s32.totalorder %s35, 1
        %s627 = scalar_select %p626, %s35, 1
        %s628 = scalar_lea.vmem %s7, %s627
        %p629 = pneg %p240
        %p630 = pneg %p237
        %p631 = scmp.lt.s32.totalorder %s35, 1
        %s632 = scalar_select %p631, %s35, 1
        %s633 = scalar_lea.vmem %s8, %s632
        %p634 = pneg %p266
        %p635 = pneg %p263
        %p636 = scmp.lt.s32.totalorder %s35, 1
        %s637 = scalar_select %p636, %s35, 1
        %s638 = scalar_lea.vmem %s9, %s637
        %p639 = pneg %p292
        %p640 = pneg %p289
        %p641 = scmp.lt.s32.totalorder %s35, 1
        %s642 = scalar_select %p641, %s35, 1
        %s643 = smul.addr %s642, 64
        %s644 = smul.addr %s643, 4
        %s645 = scalar_lea.vmem %s10, %s644
        %p646 = pneg %p318
        %p647 = pneg %p315
        %p648 = scmp.lt.s32.totalorder %s35, 1
        %s649 = scalar_select %p648, %s35, 1
        %s650 = smul.addr %s649, 4
        %s651 = scalar_lea.vmem %s11, %s650
        %p652 = pneg %p344
        %p653 = pneg %p341
        %p654 = scmp.lt.s32.totalorder %s35, 1
        %s655 = scalar_select %p654, %s35, 1
        %s656 = smul.addr %s655, 64
        %s657 = smul.addr %s656, 4
        %s658 = scalar_lea.vmem %s12, %s657
        %p659 = pneg %p370
        %p660 = pneg %p367
        %p661 = scmp.lt.s32.totalorder %s35, 1
        %s662 = scalar_select %p661, %s35, 1
        %s663 = scalar_lea.vmem %s13, %s662
        %p664 = pneg %p396
        %p665 = pneg %p393
        %p666 = pneg %p417
        %p667 = pneg %p414
        %p668 = pneg %p438
        %p669 = pneg %p435
        %p670 = pneg %p464
        %p671 = pneg %p461
        %s672 = sand.u32 %s451, 1
        %s673 = scalar_lea.sflag [#allocation4], %s672
        %s674 = sand.u32 %s451, 1
        %s675 = smul.addr %s674, 8
        %s676 = scalar_lea.vmem [#allocation3], %s675
        %p677 = scmp.lt.s32.totalorder %s34, 1
        %s678 = scalar_select %p677, %s34, 1
        %s679 = smul.addr %s678, 8
        %s680 = scalar_lea.vmem %s0, %s679
        %p681 = scmp.lt.s32.totalorder %s35, 1
        %s682 = scalar_select %p681, %s35, 1
        %s683 = scalar_lea.vmem %s2, %s682
        %p684 = scmp.lt.s32.totalorder %s35, 1
        %s685 = scalar_select %p684, %s35, 1
        %s686 = scalar_lea.vmem %s3, %s685
        %p687 = scmp.lt.s32.totalorder %s35, 1
        %s688 = scalar_select %p687, %s35, 1
        %s689 = smul.addr %s688, 48
        %s690 = smul.addr %s689, 4
        %s691 = scalar_lea.vmem %s4, %s690
        %p692 = scmp.lt.s32.totalorder %s35, 1
        %s693 = scalar_select %p692, %s35, 1
        %s694 = smul.addr %s693, 3
        %s695 = scalar_lea.vmem %s5, %s694
        %p696 = scmp.lt.s32.totalorder %s35, 1
        %s697 = scalar_select %p696, %s35, 1
        %s698 = smul.addr %s697, 16
        %s699 = smul.addr %s698, 4
        %s700 = scalar_lea.vmem %s6, %s699
        %p701 = scmp.lt.s32.totalorder %s35, 1
        %s702 = scalar_select %p701, %s35, 1
        %s703 = scalar_lea.vmem %s7, %s702
        %p704 = scmp.lt.s32.totalorder %s35, 1
        %s705 = scalar_select %p704, %s35, 1
        %s706 = scalar_lea.vmem %s8, %s705
        %p707 = scmp.lt.s32.totalorder %s35, 1
        %s708 = scalar_select %p707, %s35, 1
        %s709 = scalar_lea.vmem %s9, %s708
        %p710 = scmp.lt.s32.totalorder %s35, 1
        %s711 = scalar_select %p710, %s35, 1
        %s712 = smul.addr %s711, 64
        %s713 = smul.addr %s712, 4
        %s714 = scalar_lea.vmem %s10, %s713
        %p715 = scmp.lt.s32.totalorder %s35, 1
        %s716 = scalar_select %p715, %s35, 1
        %s717 = smul.addr %s716, 4
        %s718 = scalar_lea.vmem %s11, %s717
        %p719 = scmp.lt.s32.totalorder %s35, 1
        %s720 = scalar_select %p719, %s35, 1
        %s721 = smul.addr %s720, 64
        %s722 = smul.addr %s721, 4
        %s723 = scalar_lea.vmem %s12, %s722
        %p724 = scmp.lt.s32.totalorder %s35, 1
        %s725 = scalar_select %p724, %s35, 1
        %s726 = scalar_lea.vmem %s13, %s725
        %p728 = scmp.eq.s32.totalorder %s35, 0
        // Predicated region
        $region85: #{pico_gpt_forward.1} parent=83 // pred_check
          %p729 = pneg %p728
        $region86: #{pico_gpt_forward.1} parent=83 // pred_check_branch
          %731 = sbr.rel (%p729) target = $region88
        $region87: #{pico_gpt_forward.1} parent=83 // pred_region
          %v732 = vld [vmem:[%s680] sm:$0xff]
          %v733 = vld [vmem:[%s1] sm:$0xff]
          %v734 = vadd.f32 %v732, %v733
          %735 = vst [vmem:[#allocation2] sm:$0xff] %v734
        $region88: #{pico_gpt_forward.1} parent=83 // pred_fallthru
          _
        %v736 = vld [vmem:[#allocation2] sm:$0xff]
        %v737 = vld [vmem:[%s683] sm:$0x1]
        %v738 = vld [vmem:[%s686] sm:$0x1]
        %739 = vadd.xlane.f32.xlu0 %v736
        %v740 = vpop.xlane.xlu0 %739
        %v741 = vrcp.pop 128.0
        %v742 = vmul.f32 %v740, %v741
        %v743 = vsub.f32 %v736, %v742
        %v744 = vmul.f32 %v743, %v743
        %745 = vadd.xlane.f32.xlu0 %v744
        %v746 = vpop.xlane.xlu0 %745
        %v747 = vmul.f32 %v746, %v741
        %v748 = vadd.f32 %v747, 1e-05
        %v749 = vrsqrt.pop %v748
        %v750 = vmul.f32 %v743, %v749
        %v752 = vlaneseq
        %v753 = vshrl.u32 %v752, 7
        %v754 = vsub.s32 0, %v753
        %v755 = vrot.slane %v737, %v754
        %v757 = vmul.f32 %v750, %v755
        %v759 = vlaneseq
        %v760 = vshrl.u32 %v759, 7
        %v761 = vsub.s32 0, %v760
        %v762 = vrot.slane %v738, %v761
        %v764 = vadd.f32 %v757, %v762
        %v765 = vpack.c.bf16 %v764, %v764
        %v766 = vld [vmem:[%s691] sm:$0xff]
        %v767 = vld [vmem:[%s691 + $0x8] sm:$0xf]
        %v768 = vld [vmem:[%s691 + $0xc] sm:$0xff]
        %v769 = vld [vmem:[%s691 + $0x14] sm:$0xf]
        %v770 = vld [vmem:[%s691 + $0x18] sm:$0xff]
        %v771 = vld [vmem:[%s691 + $0x20] sm:$0xf]
        %v772 = vld [vmem:[%s691 + $0x24] sm:$0xff]
        %v773 = vld [vmem:[%s691 + $0x2c] sm:$0xf]
        %v774 = vld [vmem:[%s691 + $0x30] sm:$0xff]
        %v775 = vld [vmem:[%s691 + $0x38] sm:$0xf]
        %v776 = vld [vmem:[%s691 + $0x3c] sm:$0xff]
        %v777 = vld [vmem:[%s691 + $0x44] sm:$0xf]
        %v778 = vld [vmem:[%s691 + $0x48] sm:$0xff]
        %v779 = vld [vmem:[%s691 + $0x50] sm:$0xf]
        %v780 = vld [vmem:[%s691 + $0x54] sm:$0xff]
        %v781 = vld [vmem:[%s691 + $0x5c] sm:$0xf]
        %v782 = vld [vmem:[%s691 + $0x60] sm:$0xff]
        %v783 = vld [vmem:[%s691 + $0x68] sm:$0xf]
        %v784 = vld [vmem:[%s691 + $0x6c] sm:$0xff]
        %v785 = vld [vmem:[%s691 + $0x74] sm:$0xf]
        %v786 = vld [vmem:[%s691 + $0x78] sm:$0xff]
        %v787 = vld [vmem:[%s691 + $0x80] sm:$0xf]
        %v788 = vld [vmem:[%s691 + $0x84] sm:$0xff]
        %v789 = vld [vmem:[%s691 + $0x8c] sm:$0xf]
        %v790 = vld [vmem:[%s691 + $0x90] sm:$0xff]
        %v791 = vld [vmem:[%s691 + $0x98] sm:$0xf]
        %v792 = vld [vmem:[%s691 + $0x9c] sm:$0xff]
        %v793 = vld [vmem:[%s691 + $0xa4] sm:$0xf]
        %v794 = vld [vmem:[%s691 + $0xa8] sm:$0xff]
        %v795 = vld [vmem:[%s691 + $0xb0] sm:$0xf]
        %v796 = vld [vmem:[%s691 + $0xb4] sm:$0xff]
        %v797 = vld [vmem:[%s691 + $0xbc] sm:$0xf]
        %v798 = vld [vmem:[%s695] sm:$0x7]
        %v800 = vlaneseq
        %v801 = vshrl.u32 %v800, 7
        %v802 = vsub.s32 0, %v801
        %v803 = vrot.slane %v798, %v802
        %v804 = vlaneseq
        %v805 = vshrl.u32 %v804, 7
        %v806 = vsub.s32 1, %v805
        %v807 = vrot.slane %v798, %v806
        %v808 = vlaneseq
        %v809 = vshrl.u32 %v808, 7
        %v810 = vsub.s32 2, %v809
        %v811 = vrot.slane %v798, %v810
        %v847 = vunpack.c.l.b16 %v766
        %v848 = vunpack.c.h.b16 %v766
        %v849 = vunpack.c.l.b16 %v767
        %v850 = vunpack.c.l.b16 %v768
        %v851 = vunpack.c.h.b16 %v768
        %v852 = vunpack.c.l.b16 %v769
        %v853 = vunpack.c.l.b16 %v770
        %v854 = vunpack.c.h.b16 %v770
        %v855 = vunpack.c.l.b16 %v771
        %v856 = vunpack.c.l.b16 %v772
        %v857 = vunpack.c.h.b16 %v772
        %v858 = vunpack.c.l.b16 %v773
        %v859 = vunpack.c.l.b16 %v774
        %v860 = vunpack.c.h.b16 %v774
        %v861 = vunpack.c.l.b16 %v775
        %v862 = vunpack.c.l.b16 %v776
        %v863 = vunpack.c.h.b16 %v776
        %v864 = vunpack.c.l.b16 %v777
        %v865 = vunpack.c.l.b16 %v778
        %v866 = vunpack.c.h.b16 %v778
        %v867 = vunpack.c.l.b16 %v779
        %v868 = vunpack.c.l.b16 %v780
        %v869 = vunpack.c.h.b16 %v780
        %v870 = vunpack.c.l.b16 %v781
        %v871 = vunpack.c.l.b16 %v782
        %v872 = vunpack.c.h.b16 %v782
        %v873 = vunpack.c.l.b16 %v783
        %v874 = vunpack.c.l.b16 %v784
        %v875 = vunpack.c.h.b16 %v784
        %v876 = vunpack.c.l.b16 %v785
        %v877 = vunpack.c.l.b16 %v786
        %v878 = vunpack.c.h.b16 %v786
        %v879 = vunpack.c.l.b16 %v787
        %v880 = vunpack.c.l.b16 %v788
        %v881 = vunpack.c.h.b16 %v788
        %v882 = vunpack.c.l.b16 %v789
        %v883 = vunpack.c.l.b16 %v790
        %v884 = vunpack.c.h.b16 %v790
        %v885 = vunpack.c.l.b16 %v791
        %v886 = vunpack.c.l.b16 %v792
        %v887 = vunpack.c.h.b16 %v792
        %v888 = vunpack.c.l.b16 %v793
        %v889 = vunpack.c.l.b16 %v794
        %v890 = vunpack.c.h.b16 %v794
        %v891 = vunpack.c.l.b16 %v795
        %v892 = vunpack.c.l.b16 %v796
        %v893 = vunpack.c.h.b16 %v796
        %v894 = vunpack.c.l.b16 %v797
        %v895 = vpack.c.b16 %v850, %v847
        %v896 = vpack.c.b16 %v851, %v848
        %v897 = vpack.c.b16 %v852, %v849
        %v898 = vpack.c.b16 %v856, %v853
        %v899 = vpack.c.b16 %v857, %v854
        %v900 = vpack.c.b16 %v858, %v855
        %v901 = vpack.c.b16 %v862, %v859
        %v902 = vpack.c.b16 %v863, %v860
        %v903 = vpack.c.b16 %v864, %v861
        %v904 = vpack.c.b16 %v868, %v865
        %v905 = vpack.c.b16 %v869, %v866
        %v906 = vpack.c.b16 %v870, %v867
        %v907 = vpack.c.b16 %v874, %v871
        %v908 = vpack.c.b16 %v875, %v872
        %v909 = vpack.c.b16 %v876, %v873
        %v910 = vpack.c.b16 %v880, %v877
        %v911 = vpack.c.b16 %v881, %v878
        %v912 = vpack.c.b16 %v882, %v879
        %v913 = vpack.c.b16 %v886, %v883
        %v914 = vpack.c.b16 %v887, %v884
        %v915 = vpack.c.b16 %v888, %v885
        %v916 = vpack.c.b16 %v892, %v889
        %v917 = vpack.c.b16 %v893, %v890
        %v918 = vpack.c.b16 %v894, %v891
        %943 = vmatprep.subr.bf16.mxu0 %v896
        %944 = vmatpush1.bf16.msra.mxu0 %v895
        %945 = vmatprep.subr.bf16.mxu0 %v899
        %946 = vmatpush1.bf16.msra.mxu0 %v898
        %947 = vmatprep.subr.bf16.mxu0 %v902
        %948 = vmatpush1.bf16.msra.mxu0 %v901
        %949 = vmatprep.subr.bf16.mxu0 %v905
        %950 = vmatpush1.bf16.msra.mxu0 %v904
        %951 = vmatprep.subr.bf16.mxu0 %v908
        %952 = vmatpush1.bf16.msra.mxu0 %v907
        %953 = vmatprep.subr.bf16.mxu0 %v911
        %954 = vmatpush1.bf16.msra.mxu0 %v910
        %955 = vmatprep.subr.bf16.mxu0 %v914
        %956 = vmatpush1.bf16.msra.mxu0 %v913
        %957 = vmatprep.subr.bf16.mxu0 %v917
        %958 = vmatpush1.bf16.msra.mxu0 %v916
        %959 = vmatprep.subr.bf16.mxu0 0
        %960 = vmatpush1.bf16.msra.mxu0 0
        %961 = vmatprep.subr.bf16.mxu0 0
        %962 = vmatpush1.bf16.msra.mxu0 0
        %963 = vmatprep.subr.bf16.mxu0 0
        %964 = vmatpush1.bf16.msra.mxu0 0
        %965 = vmatprep.subr.bf16.mxu0 0
        %966 = vmatpush1.bf16.msra.mxu0 0
        %967 = vmatprep.subr.bf16.mxu0 0
        %968 = vmatpush1.bf16.msra.mxu0 0
        %969 = vmatprep.subr.bf16.mxu0 0
        %970 = vmatpush1.bf16.msra.mxu0 0
        %971 = vmatprep.subr.bf16.mxu0 0
        %972 = vmatpush1.bf16.msra.mxu0 0
        %973 = vmatprep.subr.bf16.mxu0 0
        %974 = vmatpush1.bf16.msra.mxu0 0
        %975 = vmatprep.mubr.bf16.mxu0 0
        %976 = vmatmul.mubr.bf16.gmra.mrb[0].mxu0 %v765
        %v977 = vpop.f32.mrb[0].mxu0
        %v978 = vadd.f32 %v803, %v977
        %v979 = vpop.f32.mrb[0].mxu0
        %v980 = vadd.f32 %v807, %v979
        %v981 = vpop.f32.mrb[0].mxu0
        %v982 = vpop.f32.mrb[0].mxu0
        %983 = vdwg.mxu0
        %984 = vmatprep.subr.bf16.mxu0 0
        %985 = vmatpush1.bf16.msra.mxu0 %v897
        %986 = vmatprep.subr.bf16.mxu0 0
        %987 = vmatpush1.bf16.msra.mxu0 %v900
        %988 = vmatprep.subr.bf16.mxu0 0
        %989 = vmatpush1.bf16.msra.mxu0 %v903
        %990 = vmatprep.subr.bf16.mxu0 0
        %991 = vmatpush1.bf16.msra.mxu0 %v906
        %992 = vmatprep.subr.bf16.mxu0 0
        %993 = vmatpush1.bf16.msra.mxu0 %v909
        %994 = vmatprep.subr.bf16.mxu0 0
        %995 = vmatpush1.bf16.msra.mxu0 %v912
        %996 = vmatprep.subr.bf16.mxu0 0
        %997 = vmatpush1.bf16.msra.mxu0 %v915
        %998 = vmatprep.subr.bf16.mxu0 0
        %999 = vmatpush1.bf16.msra.mxu0 %v918
        %1000 = vmatprep.subr.bf16.mxu0 0
        %1001 = vmatpush1.bf16.msra.mxu0 0
        %1002 = vmatprep.subr.bf16.mxu0 0
        %1003 = vmatpush1.bf16.msra.mxu0 0
        %1004 = vmatprep.subr.bf16.mxu0 0
        %1005 = vmatpush1.bf16.msra.mxu0 0
        %1006 = vmatprep.subr.bf16.mxu0 0
        %1007 = vmatpush1.bf16.msra.mxu0 0
        %1008 = vmatprep.subr.bf16.mxu0 0
        %1009 = vmatpush1.bf16.msra.mxu0 0
        %1010 = vmatprep.subr.bf16.mxu0 0
        %1011 = vmatpush1.bf16.msra.mxu0 0
        %1012 = vmatprep.subr.bf16.mxu0 0
        %1013 = vmatpush1.bf16.msra.mxu0 0
        %1014 = vmatprep.subr.bf16.mxu0 0
        %1015 = vmatpush1.bf16.msra.mxu0 0
        %1016 = vmatprep.mubr.bf16.mxu0 0
        %1017 = vmatmul.mubr.bf16.gmra.mrb[0].mxu0 %v765
        %v1018 = vpop.f32.mrb[0].mxu0
        %v1019 = vadd.f32 %v811, %v1018
        %v1020 = vpop.f32.mrb[0].mxu0
        %v1021 = vpop.f32.mrb[0].mxu0
        %v1022 = vpop.f32.mrb[0].mxu0
        %1023 = vdwg.mxu0
        %v1024 = vlaneseq
        %v1025 = vshrl.u32 %v1024, 7
        %v1026 = vlaneseq
        %v1027 = vand.u32 %v1026, 127
        %vm1028 = vcmp.le.s32.totalorder %v1027, %v1025
        %v1029 = vsel %vm1028, 0.0, -1e+30
        %v1030 = vpack.c.bf16 %v978, %v978
        %v1031 = vpack.c.bf16 %v980, %v980
        %vm1032 = vcmask 261120
        %v1034 = vsel %vm1032, %v1030, 0
        %v1037 = vsel %vm1032, %v1031, 0
        %1039 = vmatprep.subr.bf16.mxu0 0
        %1040 = vmatpush1.bf16.xpose.msra.mxu0 %v1037
        %1041 = vmatprep.subr.bf16.mxu0 0
        %1042 = vmatpush1.bf16.xpose.msra.mxu0 0
        %1043 = vmatprep.subr.bf16.mxu0 0
        %1044 = vmatpush1.bf16.xpose.msra.mxu0 0
        %1045 = vmatprep.subr.bf16.mxu0 0
        %1046 = vmatpush1.bf16.xpose.msra.mxu0 0
        %1047 = vmatprep.subr.bf16.mxu0 0
        %1048 = vmatpush1.bf16.xpose.msra.mxu0 0
        %1049 = vmatprep.subr.bf16.mxu0 0
        %1050 = vmatpush1.bf16.xpose.msra.mxu0 0
        %1051 = vmatprep.subr.bf16.mxu0 0
        %1052 = vmatpush1.bf16.xpose.msra.mxu0 0
        %1053 = vmatprep.subr.bf16.mxu0 0
        %1054 = vmatpush1.bf16.xpose.msra.mxu0 0
        %1055 = vmatprep.subr.bf16.mxu0 0
        %1056 = vmatpush1.bf16.xpose.msra.mxu0 0
        %1057 = vmatprep.subr.bf16.mxu0 0
        %1058 = vmatpush1.bf16.xpose.msra.mxu0 0
        %1059 = vmatprep.subr.bf16.mxu0 0
        %1060 = vmatpush1.bf16.xpose.msra.mxu0 0
        %1061 = vmatprep.subr.bf16.mxu0 0
        %1062 = vmatpush1.bf16.xpose.msra.mxu0 0
        %1063 = vmatprep.subr.bf16.mxu0 0
        %1064 = vmatpush1.bf16.xpose.msra.mxu0 0
        %1065 = vmatprep.subr.bf16.mxu0 0
        %1066 = vmatpush1.bf16.xpose.msra.mxu0 0
        %1067 = vmatprep.subr.bf16.mxu0 0
        %1068 = vmatpush1.bf16.xpose.msra.mxu0 0
        %1069 = vmatprep.subr.bf16.mxu0 0
        %1070 = vmatpush1.bf16.xpose.msra.mxu0 0
        %1071 = vmatprep.mubr.bf16.mxu0 0
        %1072 = vmatmul.mubr.bf16.gmra.mrb[0].mxu0 %v1034
        %v1073 = vpop.f32.mrb[0].mxu0
        %v1074 = vadd.f32 0.0, %v1073
        %v1075 = vpop.f32.mrb[0].mxu0
        %v1076 = vpop.f32.mrb[0].mxu0
        %v1077 = vpop.f32.mrb[0].mxu0
        %1078 = vdwg.mxu0
        %v1079 = vmul.f32 %v1074, 0.17677669
        %v1080 = vadd.f32 %v1079, %v1029
        %vm1081 = vcmask 64512
        %v1082 = vsel %vm1081, %v1080, -inf
        %1083 = vmax.xlane.f32.xlu0 %v1082
        %v1084 = vpop.xlane.xlu0 %1083
        %v1085 = vsub.f32 %v1080, %v1084
        %v1086 = vmul.f32 %v1085, 1.442695
        %v1087 = vpow.pop %v1086
        %v1088 = vsel %vm1081, %v1087, 0.0
        %1089 = vadd.xlane.f32.xlu0 %v1088
        %v1090 = vpop.xlane.xlu0 %1089
        %v1091 = vrcp.pop %v1090
        %v1092 = vmul.f32 %v1087, %v1091
        %v1093 = vpack.c.bf16 %v1092, %v1092
        %v1094 = vpack.c.bf16 %v1019, %v1019
        %v1096 = vsel %vm1081, %v1093, 0
        %vm1098 = vcmask 1043456
        %v1100 = vsel %vm1098, %v1094, 0
        %1102 = vmatprep.subr.bf16.mxu0 0
        %1103 = vmatpush1.bf16.msra.mxu0 %v1100
        %1104 = vmatprep.subr.bf16.mxu0 0
        %1105 = vmatpush1.bf16.msra.mxu0 0
        %1106 = vmatprep.subr.bf16.mxu0 0
        %1107 = vmatpush1.bf16.msra.mxu0 0
        %1108 = vmatprep.subr.bf16.mxu0 0
        %1109 = vmatpush1.bf16.msra.mxu0 0
        %1110 = vmatprep.subr.bf16.mxu0 0
        %1111 = vmatpush1.bf16.msra.mxu0 0
        %1112 = vmatprep.subr.bf16.mxu0 0
        %1113 = vmatpush1.bf16.msra.mxu0 0
        %1114 = vmatprep.subr.bf16.mxu0 0
        %1115 = vmatpush1.bf16.msra.mxu0 0
        %1116 = vmatprep.subr.bf16.mxu0 0
        %1117 = vmatpush1.bf16.msra.mxu0 0
        %1118 = vmatprep.subr.bf16.mxu0 0
        %1119 = vmatpush1.bf16.msra.mxu0 0
        %1120 = vmatprep.subr.bf16.mxu0 0
        %1121 = vmatpush1.bf16.msra.mxu0 0
        %1122 = vmatprep.subr.bf16.mxu0 0
        %1123 = vmatpush1.bf16.msra.mxu0 0
        %1124 = vmatprep.subr.bf16.mxu0 0
        %1125 = vmatpush1.bf16.msra.mxu0 0
        %1126 = vmatprep.subr.bf16.mxu0 0
        %1127 = vmatpush1.bf16.msra.mxu0 0
        %1128 = vmatprep.subr.bf16.mxu0 0
        %1129 = vmatpush1.bf16.msra.mxu0 0
        %1130 = vmatprep.subr.bf16.mxu0 0
        %1131 = vmatpush1.bf16.msra.mxu0 0
        %1132 = vmatprep.subr.bf16.mxu0 0
        %1133 = vmatpush1.bf16.msra.mxu0 0
        %1134 = vmatprep.mubr.bf16.mxu0 0
        %1135 = vmatmul.mubr.bf16.gmra.mrb[0].mxu0 %v1096
        %v1136 = vpop.f32.mrb[0].mxu0
        %v1137 = vadd.f32 0.0, %v1136
        %v1138 = vpop.f32.mrb[0].mxu0
        %v1139 = vpop.f32.mrb[0].mxu0
        %v1140 = vpop.f32.mrb[0].mxu0
        %1141 = vdwg.mxu0
        %1143 = vrot.lane.b32.xlu0 %v1030, 96
        %v1144 = vpop.permute.xlu0 %1143
        %1146 = vrot.lane.b32.xlu0 %v1031, 96
        %v1147 = vpop.permute.xlu0 %1146
        %v1149 = vsel %vm1032, %v1144, 0
        %v1152 = vsel %vm1032, %v1147, 0
        %1154 = vmatprep.subr.bf16.mxu0 0
        %1155 = vmatpush1.bf16.xpose.msra.mxu0 %v1152
        %1156 = vmatprep.subr.bf16.mxu0 0
        %1157 = vmatpush1.bf16.xpose.msra.mxu0 0
        %1158 = vmatprep.subr.bf16.mxu0 0
        %1159 = vmatpush1.bf16.xpose.msra.mxu0 0
        %1160 = vmatprep.subr.bf16.mxu0 0
        %1161 = vmatpush1.bf16.xpose.msra.mxu0 0
        %1162 = vmatprep.subr.bf16.mxu0 0
        %1163 = vmatpush1.bf16.xpose.msra.mxu0 0
        %1164 = vmatprep.subr.bf16.mxu0 0
        %1165 = vmatpush1.bf16.xpose.msra.mxu0 0
        %1166 = vmatprep.subr.bf16.mxu0 0
        %1167 = vmatpush1.bf16.xpose.msra.mxu0 0
        %1168 = vmatprep.subr.bf16.mxu0 0
        %1169 = vmatpush1.bf16.xpose.msra.mxu0 0
        %1170 = vmatprep.subr.bf16.mxu0 0
        %1171 = vmatpush1.bf16.xpose.msra.mxu0 0
        %1172 = vmatprep.subr.bf16.mxu0 0
        %1173 = vmatpush1.bf16.xpose.msra.mxu0 0
        %1174 = vmatprep.subr.bf16.mxu0 0
        %1175 = vmatpush1.bf16.xpose.msra.mxu0 0
        %1176 = vmatprep.subr.bf16.mxu0 0
        %1177 = vmatpush1.bf16.xpose.msra.mxu0 0
        %1178 = vmatprep.subr.bf16.mxu0 0
        %1179 = vmatpush1.bf16.xpose.msra.mxu0 0
        %1180 = vmatprep.subr.bf16.mxu0 0
        %1181 = vmatpush1.bf16.xpose.msra.mxu0 0
        %1182 = vmatprep.subr.bf16.mxu0 0
        %1183 = vmatpush1.bf16.xpose.msra.mxu0 0
        %1184 = vmatprep.subr.bf16.mxu0 0
        %1185 = vmatpush1.bf16.xpose.msra.mxu0 0
        %1186 = vmatprep.mubr.bf16.mxu0 0
        %1187 = vmatmul.mubr.bf16.gmra.mrb[0].mxu0 %v1149
        %v1188 = vpop.f32.mrb[0].mxu0
        %v1189 = vadd.f32 0.0, %v1188
        %v1190 = vpop.f32.mrb[0].mxu0
        %v1191 = vpop.f32.mrb[0].mxu0
        %v1192 = vpop.f32.mrb[0].mxu0
        %1193 = vdwg.mxu0
        %v1194 = vmul.f32 %v1189, 0.17677669
        %v1195 = vadd.f32 %v1194, %v1029
        %v1196 = vsel %vm1081, %v1195, -inf
        %1197 = vmax.xlane.f32.xlu0 %v1196
        %v1198 = vpop.xlane.xlu0 %1197
        %v1199 = vsub.f32 %v1195, %v1198
        %v1200 = vmul.f32 %v1199, 1.442695
        %v1201 = vpow.pop %v1200
        %v1202 = vsel %vm1081, %v1201, 0.0
        %1203 = vadd.xlane.f32.xlu0 %v1202
        %v1204 = vpop.xlane.xlu0 %1203
        %v1205 = vrcp.pop %v1204
        %v1206 = vmul.f32 %v1201, %v1205
        %v1207 = vpack.c.bf16 %v1206, %v1206
        %1209 = vrot.lane.b32.xlu0 %v1094, 96
        %v1210 = vpop.permute.xlu0 %1209
        %v1212 = vsel %vm1081, %v1207, 0
        %v1215 = vsel %vm1098, %v1210, 0
        %1217 = vmatprep.subr.bf16.mxu0 0
        %1218 = vmatpush1.bf16.msra.mxu0 %v1215
        %1219 = vmatprep.subr.bf16.mxu0 0
        %1220 = vmatpush1.bf16.msra.mxu0 0
        %1221 = vmatprep.subr.bf16.mxu0 0
        %1222 = vmatpush1.bf16.msra.mxu0 0
        %1223 = vmatprep.subr.bf16.mxu0 0
        %1224 = vmatpush1.bf16.msra.mxu0 0
        %1225 = vmatprep.subr.bf16.mxu0 0
        %1226 = vmatpush1.bf16.msra.mxu0 0
        %1227 = vmatprep.subr.bf16.mxu0 0
        %1228 = vmatpush1.bf16.msra.mxu0 0
        %1229 = vmatprep.subr.bf16.mxu0 0
        %1230 = vmatpush1.bf16.msra.mxu0 0
        %1231 = vmatprep.subr.bf16.mxu0 0
        %1232 = vmatpush1.bf16.msra.mxu0 0
        %1233 = vmatprep.subr.bf16.mxu0 0
        %1234 = vmatpush1.bf16.msra.mxu0 0
        %1235 = vmatprep.subr.bf16.mxu0 0
        %1236 = vmatpush1.bf16.msra.mxu0 0
        %1237 = vmatprep.subr.bf16.mxu0 0
        %1238 = vmatpush1.bf16.msra.mxu0 0
        %1239 = vmatprep.subr.bf16.mxu0 0
        %1240 = vmatpush1.bf16.msra.mxu0 0
        %1241 = vmatprep.subr.bf16.mxu0 0
        %1242 = vmatpush1.bf16.msra.mxu0 0
        %1243 = vmatprep.subr.bf16.mxu0 0
        %1244 = vmatpush1.bf16.msra.mxu0 0
        %1245 = vmatprep.subr.bf16.mxu0 0
        %1246 = vmatpush1.bf16.msra.mxu0 0
        %1247 = vmatprep.subr.bf16.mxu0 0
        %1248 = vmatpush1.bf16.msra.mxu0 0
        %1249 = vmatprep.mubr.bf16.mxu0 0
        %1250 = vmatmul.mubr.bf16.gmra.mrb[0].mxu0 %v1212
        %v1251 = vpop.f32.mrb[0].mxu0
        %v1252 = vadd.f32 0.0, %v1251
        %v1253 = vpop.f32.mrb[0].mxu0
        %v1254 = vpop.f32.mrb[0].mxu0
        %v1255 = vpop.f32.mrb[0].mxu0
        %1256 = vdwg.mxu0
        %1257 = vrot.lane.b32.xlu0 %v1030, 64
        %v1258 = vpop.permute.xlu0 %1257
        %1259 = vrot.lane.b32.xlu0 %v1031, 64
        %v1260 = vpop.permute.xlu0 %1259
        %v1262 = vsel %vm1032, %v1258, 0
        %v1265 = vsel %vm1032, %v1260, 0
        %1267 = vmatprep.subr.bf16.mxu0 0
        %1268 = vmatpush1.bf16.xpose.msra.mxu0 %v1265
        %1269 = vmatprep.subr.bf16.mxu0 0
        %1270 = vmatpush1.bf16.xpose.msra.mxu0 0
        %1271 = vmatprep.subr.bf16.mxu0 0
        %1272 = vmatpush1.bf16.xpose.msra.mxu0 0
        %1273 = vmatprep.subr.bf16.mxu0 0
        %1274 = vmatpush1.bf16.xpose.msra.mxu0 0
        %1275 = vmatprep.subr.bf16.mxu0 0
        %1276 = vmatpush1.bf16.xpose.msra.mxu0 0
        %1277 = vmatprep.subr.bf16.mxu0 0
        %1278 = vmatpush1.bf16.xpose.msra.mxu0 0
        %1279 = vmatprep.subr.bf16.mxu0 0
        %1280 = vmatpush1.bf16.xpose.msra.mxu0 0
        %1281 = vmatprep.subr.bf16.mxu0 0
        %1282 = vmatpush1.bf16.xpose.msra.mxu0 0
        %1283 = vmatprep.subr.bf16.mxu0 0
        %1284 = vmatpush1.bf16.xpose.msra.mxu0 0
        %1285 = vmatprep.subr.bf16.mxu0 0
        %1286 = vmatpush1.bf16.xpose.msra.mxu0 0
        %1287 = vmatprep.subr.bf16.mxu0 0
        %1288 = vmatpush1.bf16.xpose.msra.mxu0 0
        %1289 = vmatprep.subr.bf16.mxu0 0
        %1290 = vmatpush1.bf16.xpose.msra.mxu0 0
        %1291 = vmatprep.subr.bf16.mxu0 0
        %1292 = vmatpush1.bf16.xpose.msra.mxu0 0
        %1293 = vmatprep.subr.bf16.mxu0 0
        %1294 = vmatpush1.bf16.xpose.msra.mxu0 0
        %1295 = vmatprep.subr.bf16.mxu0 0
        %1296 = vmatpush1.bf16.xpose.msra.mxu0 0
        %1297 = vmatprep.subr.bf16.mxu0 0
        %1298 = vmatpush1.bf16.xpose.msra.mxu0 0
        %1299 = vmatprep.mubr.bf16.mxu0 0
        %1300 = vmatmul.mubr.bf16.gmra.mrb[0].mxu0 %v1262
        %v1301 = vpop.f32.mrb[0].mxu0
        %v1302 = vadd.f32 0.0, %v1301
        %v1303 = vpop.f32.mrb[0].mxu0
        %v1304 = vpop.f32.mrb[0].mxu0
        %v1305 = vpop.f32.mrb[0].mxu0
        %1306 = vdwg.mxu0
        %v1307 = vmul.f32 %v1302, 0.17677669
        %v1308 = vadd.f32 %v1307, %v1029
        %v1309 = vsel %vm1081, %v1308, -inf
        %1310 = vmax.xlane.f32.xlu0 %v1309
        %v1311 = vpop.xlane.xlu0 %1310
        %v1312 = vsub.f32 %v1308, %v1311
        %v1313 = vmul.f32 %v1312, 1.442695
        %v1314 = vpow.pop %v1313
        %v1315 = vsel %vm1081, %v1314, 0.0
        %1316 = vadd.xlane.f32.xlu0 %v1315
        %v1317 = vpop.xlane.xlu0 %1316
        %v1318 = vrcp.pop %v1317
        %v1319 = vmul.f32 %v1314, %v1318
        %v1320 = vpack.c.bf16 %v1319, %v1319
        %1321 = vrot.lane.b32.xlu0 %v1094, 64
        %v1322 = vpop.permute.xlu0 %1321
        %v1324 = vsel %vm1081, %v1320, 0
        %v1327 = vsel %vm1098, %v1322, 0
        %1329 = vmatprep.subr.bf16.mxu0 0
        %1330 = vmatpush1.bf16.msra.mxu0 %v1327
        %1331 = vmatprep.subr.bf16.mxu0 0
        %1332 = vmatpush1.bf16.msra.mxu0 0
        %1333 = vmatprep.subr.bf16.mxu0 0
        %1334 = vmatpush1.bf16.msra.mxu0 0
        %1335 = vmatprep.subr.bf16.mxu0 0
        %1336 = vmatpush1.bf16.msra.mxu0 0
        %1337 = vmatprep.subr.bf16.mxu0 0
        %1338 = vmatpush1.bf16.msra.mxu0 0
        %1339 = vmatprep.subr.bf16.mxu0 0
        %1340 = vmatpush1.bf16.msra.mxu0 0
        %1341 = vmatprep.subr.bf16.mxu0 0
        %1342 = vmatpush1.bf16.msra.mxu0 0
        %1343 = vmatprep.subr.bf16.mxu0 0
        %1344 = vmatpush1.bf16.msra.mxu0 0
        %1345 = vmatprep.subr.bf16.mxu0 0
        %1346 = vmatpush1.bf16.msra.mxu0 0
        %1347 = vmatprep.subr.bf16.mxu0 0
        %1348 = vmatpush1.bf16.msra.mxu0 0
        %1349 = vmatprep.subr.bf16.mxu0 0
        %1350 = vmatpush1.bf16.msra.mxu0 0
        %1351 = vmatprep.subr.bf16.mxu0 0
        %1352 = vmatpush1.bf16.msra.mxu0 0
        %1353 = vmatprep.subr.bf16.mxu0 0
        %1354 = vmatpush1.bf16.msra.mxu0 0
        %1355 = vmatprep.subr.bf16.mxu0 0
        %1356 = vmatpush1.bf16.msra.mxu0 0
        %1357 = vmatprep.subr.bf16.mxu0 0
        %1358 = vmatpush1.bf16.msra.mxu0 0
        %1359 = vmatprep.subr.bf16.mxu0 0
        %1360 = vmatpush1.bf16.msra.mxu0 0
        %1361 = vmatprep.mubr.bf16.mxu0 0
        %1362 = vmatmul.mubr.bf16.gmra.mrb[0].mxu0 %v1324
        %v1363 = vpop.f32.mrb[0].mxu0
        %v1364 = vadd.f32 0.0, %v1363
        %v1365 = vpop.f32.mrb[0].mxu0
        %v1366 = vpop.f32.mrb[0].mxu0
        %v1367 = vpop.f32.mrb[0].mxu0
        %1368 = vdwg.mxu0
        %1369 = vrot.lane.b32.xlu0 %v1030, 32
        %v1370 = vpop.permute.xlu0 %1369
        %1371 = vrot.lane.b32.xlu0 %v1031, 32
        %v1372 = vpop.permute.xlu0 %1371
        %v1374 = vsel %vm1032, %v1370, 0
        %v1377 = vsel %vm1032, %v1372, 0
        %1379 = vmatprep.subr.bf16.mxu0 0
        %1380 = vmatpush1.bf16.xpose.msra.mxu0 %v1377
        %1381 = vmatprep.subr.bf16.mxu0 0
        %1382 = vmatpush1.bf16.xpose.msra.mxu0 0
        %1383 = vmatprep.subr.bf16.mxu0 0
        %1384 = vmatpush1.bf16.xpose.msra.mxu0 0
        %1385 = vmatprep.subr.bf16.mxu0 0
        %1386 = vmatpush1.bf16.xpose.msra.mxu0 0
        %1387 = vmatprep.subr.bf16.mxu0 0
        %1388 = vmatpush1.bf16.xpose.msra.mxu0 0
        %1389 = vmatprep.subr.bf16.mxu0 0
        %1390 = vmatpush1.bf16.xpose.msra.mxu0 0
        %1391 = vmatprep.subr.bf16.mxu0 0
        %1392 = vmatpush1.bf16.xpose.msra.mxu0 0
        %1393 = vmatprep.subr.bf16.mxu0 0
        %1394 = vmatpush1.bf16.xpose.msra.mxu0 0
        %1395 = vmatprep.subr.bf16.mxu0 0
        %1396 = vmatpush1.bf16.xpose.msra.mxu0 0
        %1397 = vmatprep.subr.bf16.mxu0 0
        %1398 = vmatpush1.bf16.xpose.msra.mxu0 0
        %1399 = vmatprep.subr.bf16.mxu0 0
        %1400 = vmatpush1.bf16.xpose.msra.mxu0 0
        %1401 = vmatprep.subr.bf16.mxu0 0
        %1402 = vmatpush1.bf16.xpose.msra.mxu0 0
        %1403 = vmatprep.subr.bf16.mxu0 0
        %1404 = vmatpush1.bf16.xpose.msra.mxu0 0
        %1405 = vmatprep.subr.bf16.mxu0 0
        %1406 = vmatpush1.bf16.xpose.msra.mxu0 0
        %1407 = vmatprep.subr.bf16.mxu0 0
        %1408 = vmatpush1.bf16.xpose.msra.mxu0 0
        %1409 = vmatprep.subr.bf16.mxu0 0
        %1410 = vmatpush1.bf16.xpose.msra.mxu0 0
        %1411 = vmatprep.mubr.bf16.mxu0 0
        %1412 = vmatmul.mubr.bf16.gmra.mrb[0].mxu0 %v1374
        %v1413 = vpop.f32.mrb[0].mxu0
        %v1414 = vadd.f32 0.0, %v1413
        %v1415 = vpop.f32.mrb[0].mxu0
        %v1416 = vpop.f32.mrb[0].mxu0
        %v1417 = vpop.f32.mrb[0].mxu0
        %1418 = vdwg.mxu0
        %v1419 = vmul.f32 %v1414, 0.17677669
        %v1420 = vadd.f32 %v1419, %v1029
        %v1421 = vsel %vm1081, %v1420, -inf
        %1422 = vmax.xlane.f32.xlu0 %v1421
        %v1423 = vpop.xlane.xlu0 %1422
        %v1424 = vsub.f32 %v1420, %v1423
        %v1425 = vmul.f32 %v1424, 1.442695
        %v1426 = vpow.pop %v1425
        %v1427 = vsel %vm1081, %v1426, 0.0
        %1428 = vadd.xlane.f32.xlu0 %v1427
        %v1429 = vpop.xlane.xlu0 %1428
        %v1430 = vrcp.pop %v1429
        %v1431 = vmul.f32 %v1426, %v1430
        %v1432 = vpack.c.bf16 %v1431, %v1431
        %1433 = vrot.lane.b32.xlu0 %v1094, 32
        %v1434 = vpop.permute.xlu0 %1433
        %v1436 = vsel %vm1081, %v1432, 0
        %v1439 = vsel %vm1098, %v1434, 0
        %1441 = vmatprep.subr.bf16.mxu0 0
        %1442 = vmatpush1.bf16.msra.mxu0 %v1439
        %1443 = vmatprep.subr.bf16.mxu0 0
        %1444 = vmatpush1.bf16.msra.mxu0 0
        %1445 = vmatprep.subr.bf16.mxu0 0
        %1446 = vmatpush1.bf16.msra.mxu0 0
        %1447 = vmatprep.subr.bf16.mxu0 0
        %1448 = vmatpush1.bf16.msra.mxu0 0
        %1449 = vmatprep.subr.bf16.mxu0 0
        %1450 = vmatpush1.bf16.msra.mxu0 0
        %1451 = vmatprep.subr.bf16.mxu0 0
        %1452 = vmatpush1.bf16.msra.mxu0 0
        %1453 = vmatprep.subr.bf16.mxu0 0
        %1454 = vmatpush1.bf16.msra.mxu0 0
        %1455 = vmatprep.subr.bf16.mxu0 0
        %1456 = vmatpush1.bf16.msra.mxu0 0
        %1457 = vmatprep.subr.bf16.mxu0 0
        %1458 = vmatpush1.bf16.msra.mxu0 0
        %1459 = vmatprep.subr.bf16.mxu0 0
        %1460 = vmatpush1.bf16.msra.mxu0 0
        %1461 = vmatprep.subr.bf16.mxu0 0
        %1462 = vmatpush1.bf16.msra.mxu0 0
        %1463 = vmatprep.subr.bf16.mxu0 0
        %1464 = vmatpush1.bf16.msra.mxu0 0
        %1465 = vmatprep.subr.bf16.mxu0 0
        %1466 = vmatpush1.bf16.msra.mxu0 0
        %1467 = vmatprep.subr.bf16.mxu0 0
        %1468 = vmatpush1.bf16.msra.mxu0 0
        %1469 = vmatprep.subr.bf16.mxu0 0
        %1470 = vmatpush1.bf16.msra.mxu0 0
        %1471 = vmatprep.subr.bf16.mxu0 0
        %1472 = vmatpush1.bf16.msra.mxu0 0
        %1473 = vmatprep.mubr.bf16.mxu0 0
        %1474 = vmatmul.mubr.bf16.gmra.mrb[0].mxu0 %v1436
        %v1475 = vpop.f32.mrb[0].mxu0
        %v1476 = vadd.f32 0.0, %v1475
        %v1477 = vpop.f32.mrb[0].mxu0
        %v1478 = vpop.f32.mrb[0].mxu0
        %v1479 = vpop.f32.mrb[0].mxu0
        %1480 = vdwg.mxu0
        %1482 = vrot.lane.b32.xlu0 %v1252, 32
        %v1483 = vpop.permute.xlu0 %1482
        %1486 = vrot.lane.b32.xlu0 %v1364, 64
        %v1487 = vpop.permute.xlu0 %1486
        %1490 = vrot.lane.b32.xlu0 %v1476, 96
        %v1491 = vpop.permute.xlu0 %1490
        %v1493 = vsel %vm1032, %v1137, %v1483
        %vm1494 = vcmask 523264
        %v1495 = vsel %vm1494, %v1493, %v1487
        %vm1496 = vcmask 785408
        %v1497 = vsel %vm1496, %v1495, %v1491
        %v1498 = vpack.c.bf16 %v1497, %v1497
        %v1499 = vld [vmem:[%s700] sm:$0xf]
        %v1500 = vld [vmem:[%s700 + $0x4] sm:$0xf]
        %v1501 = vld [vmem:[%s700 + $0x8] sm:$0xf]
        %v1502 = vld [vmem:[%s700 + $0xc] sm:$0xf]
        %v1503 = vld [vmem:[%s700 + $0x10] sm:$0xf]
        %v1504 = vld [vmem:[%s700 + $0x14] sm:$0xf]
        %v1505 = vld [vmem:[%s700 + $0x18] sm:$0xf]
        %v1506 = vld [vmem:[%s700 + $0x1c] sm:$0xf]
        %v1507 = vld [vmem:[%s700 + $0x20] sm:$0xf]
        %v1508 = vld [vmem:[%s700 + $0x24] sm:$0xf]
        %v1509 = vld [vmem:[%s700 + $0x28] sm:$0xf]
        %v1510 = vld [vmem:[%s700 + $0x2c] sm:$0xf]
        %v1511 = vld [vmem:[%s700 + $0x30] sm:$0xf]
        %v1512 = vld [vmem:[%s700 + $0x34] sm:$0xf]
        %v1513 = vld [vmem:[%s700 + $0x38] sm:$0xf]
        %v1514 = vld [vmem:[%s700 + $0x3c] sm:$0xf]
        %v1515 = vld [vmem:[%s703] sm:$0x1]
        %v1517 = vlaneseq
        %v1518 = vshrl.u32 %v1517, 7
        %v1519 = vsub.s32 0, %v1518
        %v1520 = vrot.slane %v1515, %v1519
        %v1538 = vunpack.c.l.b16 %v1499
        %v1539 = vunpack.c.l.b16 %v1500
        %v1540 = vunpack.c.l.b16 %v1501
        %v1541 = vunpack.c.l.b16 %v1502
        %v1542 = vunpack.c.l.b16 %v1503
        %v1543 = vunpack.c.l.b16 %v1504
        %v1544 = vunpack.c.l.b16 %v1505
        %v1545 = vunpack.c.l.b16 %v1506
        %v1546 = vunpack.c.l.b16 %v1507
        %v1547 = vunpack.c.l.b16 %v1508
        %v1548 = vunpack.c.l.b16 %v1509
        %v1549 = vunpack.c.l.b16 %v1510
        %v1550 = vunpack.c.l.b16 %v1511
        %v1551 = vunpack.c.l.b16 %v1512
        %v1552 = vunpack.c.l.b16 %v1513
        %v1553 = vunpack.c.l.b16 %v1514
        %v1554 = vpack.c.b16 %v1539, %v1538
        %v1555 = vpack.c.b16 %v1541, %v1540
        %v1556 = vpack.c.b16 %v1543, %v1542
        %v1557 = vpack.c.b16 %v1545, %v1544
        %v1558 = vpack.c.b16 %v1547, %v1546
        %v1559 = vpack.c.b16 %v1549, %v1548
        %v1560 = vpack.c.b16 %v1551, %v1550
        %v1561 = vpack.c.b16 %v1553, %v1552
        %1570 = vmatprep.subr.bf16.mxu0 0
        %1571 = vmatpush1.bf16.msra.mxu0 %v1554
        %1572 = vmatprep.subr.bf16.mxu0 0
        %1573 = vmatpush1.bf16.msra.mxu0 %v1555
        %1574 = vmatprep.subr.bf16.mxu0 0
        %1575 = vmatpush1.bf16.msra.mxu0 %v1556
        %1576 = vmatprep.subr.bf16.mxu0 0
        %1577 = vmatpush1.bf16.msra.mxu0 %v1557
        %1578 = vmatprep.subr.bf16.mxu0 0
        %1579 = vmatpush1.bf16.msra.mxu0 %v1558
        %1580 = vmatprep.subr.bf16.mxu0 0
        %1581 = vmatpush1.bf16.msra.mxu0 %v1559
        %1582 = vmatprep.subr.bf16.mxu0 0
        %1583 = vmatpush1.bf16.msra.mxu0 %v1560
        %1584 = vmatprep.subr.bf16.mxu0 0
        %1585 = vmatpush1.bf16.msra.mxu0 %v1561
        %1586 = vmatprep.subr.bf16.mxu0 0
        %1587 = vmatpush1.bf16.msra.mxu0 0
        %1588 = vmatprep.subr.bf16.mxu0 0
        %1589 = vmatpush1.bf16.msra.mxu0 0
        %1590 = vmatprep.subr.bf16.mxu0 0
        %1591 = vmatpush1.bf16.msra.mxu0 0
        %1592 = vmatprep.subr.bf16.mxu0 0
        %1593 = vmatpush1.bf16.msra.mxu0 0
        %1594 = vmatprep.subr.bf16.mxu0 0
        %1595 = vmatpush1.bf16.msra.mxu0 0
        %1596 = vmatprep.subr.bf16.mxu0 0
        %1597 = vmatpush1.bf16.msra.mxu0 0
        %1598 = vmatprep.subr.bf16.mxu0 0
        %1599 = vmatpush1.bf16.msra.mxu0 0
        %1600 = vmatprep.subr.bf16.mxu0 0
        %1601 = vmatpush1.bf16.msra.mxu0 0
        %1602 = vmatprep.mubr.bf16.mxu0 0
        %1603 = vmatmul.mubr.bf16.gmra.mrb[0].mxu0 %v1498
        %v1604 = vpop.f32.mrb[0].mxu0
        %v1605 = vadd.f32 %v1520, %v1604
        %v1606 = vpop.f32.mrb[0].mxu0
        %v1607 = vpop.f32.mrb[0].mxu0
        %v1608 = vpop.f32.mrb[0].mxu0
        %1609 = vdwg.mxu0
        %v1610 = vadd.f32 %v736, %v1605
        %v1611 = vld [vmem:[%s706] sm:$0x1]
        %v1612 = vld [vmem:[%s709] sm:$0x1]
        %1613 = vadd.xlane.f32.xlu0 %v1610
        %v1614 = vpop.xlane.xlu0 %1613
        %v1615 = vmul.f32 %v1614, %v741
        %v1616 = vsub.f32 %v1610, %v1615
        %v1617 = vmul.f32 %v1616, %v1616
        %1618 = vadd.xlane.f32.xlu0 %v1617
        %v1619 = vpop.xlane.xlu0 %1618
        %v1620 = vmul.f32 %v1619, %v741
        %v1621 = vadd.f32 %v1620, 1e-05
        %v1622 = vrsqrt.pop %v1621
        %v1623 = vmul.f32 %v1616, %v1622
        %v1625 = vlaneseq
        %v1626 = vshrl.u32 %v1625, 7
        %v1627 = vsub.s32 0, %v1626
        %v1628 = vrot.slane %v1611, %v1627
        %v1630 = vmul.f32 %v1623, %v1628
        %v1632 = vlaneseq
        %v1633 = vshrl.u32 %v1632, 7
        %v1634 = vsub.s32 0, %v1633
        %v1635 = vrot.slane %v1612, %v1634
        %v1637 = vadd.f32 %v1630, %v1635
        %v1638 = vpack.c.bf16 %v1637, %v1637
        %v1639 = vld [vmem:[%s714] sm:$0xff]
        %v1640 = vld [vmem:[%s714 + $0x8] sm:$0xff]
        %v1641 = vld [vmem:[%s714 + $0x10] sm:$0xff]
        %v1642 = vld [vmem:[%s714 + $0x18] sm:$0xff]
        %v1643 = vld [vmem:[%s714 + $0x20] sm:$0xff]
        %v1644 = vld [vmem:[%s714 + $0x28] sm:$0xff]
        %v1645 = vld [vmem:[%s714 + $0x30] sm:$0xff]
        %v1646 = vld [vmem:[%s714 + $0x38] sm:$0xff]
        %v1647 = vld [vmem:[%s714 + $0x40] sm:$0xff]
        %v1648 = vld [vmem:[%s714 + $0x48] sm:$0xff]
        %v1649 = vld [vmem:[%s714 + $0x50] sm:$0xff]
        %v1650 = vld [vmem:[%s714 + $0x58] sm:$0xff]
        %v1651 = vld [vmem:[%s714 + $0x60] sm:$0xff]
        %v1652 = vld [vmem:[%s714 + $0x68] sm:$0xff]
        %v1653 = vld [vmem:[%s714 + $0x70] sm:$0xff]
        %v1654 = vld [vmem:[%s714 + $0x78] sm:$0xff]
        %v1655 = vld [vmem:[%s714 + $0x80] sm:$0xff]
        %v1656 = vld [vmem:[%s714 + $0x88] sm:$0xff]
        %v1657 = vld [vmem:[%s714 + $0x90] sm:$0xff]
        %v1658 = vld [vmem:[%s714 + $0x98] sm:$0xff]
        %v1659 = vld [vmem:[%s714 + $0xa0] sm:$0xff]
        %v1660 = vld [vmem:[%s714 + $0xa8] sm:$0xff]
        %v1661 = vld [vmem:[%s714 + $0xb0] sm:$0xff]
        %v1662 = vld [vmem:[%s714 + $0xb8] sm:$0xff]
        %v1663 = vld [vmem:[%s714 + $0xc0] sm:$0xff]
        %v1664 = vld [vmem:[%s714 + $0xc8] sm:$0xff]
        %v1665 = vld [vmem:[%s714 + $0xd0] sm:$0xff]
        %v1666 = vld [vmem:[%s714 + $0xd8] sm:$0xff]
        %v1667 = vld [vmem:[%s714 + $0xe0] sm:$0xff]
        %v1668 = vld [vmem:[%s714 + $0xe8] sm:$0xff]
        %v1669 = vld [vmem:[%s714 + $0xf0] sm:$0xff]
        %v1670 = vld [vmem:[%s714 + $0xf8] sm:$0xff]
        %v1671 = vld [vmem:[%s718] sm:$0xf]
        %v1673 = vlaneseq
        %v1674 = vshrl.u32 %v1673, 7
        %v1675 = vsub.s32 0, %v1674
        %v1676 = vrot.slane %v1671, %v1675
        %v1677 = vlaneseq
        %v1678 = vshrl.u32 %v1677, 7
        %v1679 = vsub.s32 1, %v1678
        %v1680 = vrot.slane %v1671, %v1679
        %v1681 = vlaneseq
        %v1682 = vshrl.u32 %v1681, 7
        %v1683 = vsub.s32 2, %v1682
        %v1684 = vrot.slane %v1671, %v1683
        %v1685 = vlaneseq
        %v1686 = vshrl.u32 %v1685, 7
        %v1687 = vsub.s32 3, %v1686
        %v1688 = vrot.slane %v1671, %v1687
        %v1725 = vunpack.c.l.b16 %v1639
        %v1726 = vunpack.c.h.b16 %v1639
        %v1727 = vunpack.c.l.b16 %v1640
        %v1728 = vunpack.c.h.b16 %v1640
        %v1729 = vunpack.c.l.b16 %v1641
        %v1730 = vunpack.c.h.b16 %v1641
        %v1731 = vunpack.c.l.b16 %v1642
        %v1732 = vunpack.c.h.b16 %v1642
        %v1733 = vunpack.c.l.b16 %v1643
        %v1734 = vunpack.c.h.b16 %v1643
        %v1735 = vunpack.c.l.b16 %v1644
        %v1736 = vunpack.c.h.b16 %v1644
        %v1737 = vunpack.c.l.b16 %v1645
        %v1738 = vunpack.c.h.b16 %v1645
        %v1739 = vunpack.c.l.b16 %v1646
        %v1740 = vunpack.c.h.b16 %v1646
        %v1741 = vunpack.c.l.b16 %v1647
        %v1742 = vunpack.c.h.b16 %v1647
        %v1743 = vunpack.c.l.b16 %v1648
        %v1744 = vunpack.c.h.b16 %v1648
        %v1745 = vunpack.c.l.b16 %v1649
        %v1746 = vunpack.c.h.b16 %v1649
        %v1747 = vunpack.c.l.b16 %v1650
        %v1748 = vunpack.c.h.b16 %v1650
        %v1749 = vunpack.c.l.b16 %v1651
        %v1750 = vunpack.c.h.b16 %v1651
        %v1751 = vunpack.c.l.b16 %v1652
        %v1752 = vunpack.c.h.b16 %v1652
        %v1753 = vunpack.c.l.b16 %v1653
        %v1754 = vunpack.c.h.b16 %v1653
        %v1755 = vunpack.c.l.b16 %v1654
        %v1756 = vunpack.c.h.b16 %v1654
        %v1757 = vunpack.c.l.b16 %v1655
        %v1758 = vunpack.c.h.b16 %v1655
        %v1759 = vunpack.c.l.b16 %v1656
        %v1760 = vunpack.c.h.b16 %v1656
        %v1761 = vunpack.c.l.b16 %v1657
        %v1762 = vunpack.c.h.b16 %v1657
        %v1763 = vunpack.c.l.b16 %v1658
        %v1764 = vunpack.c.h.b16 %v1658
        %v1765 = vunpack.c.l.b16 %v1659
        %v1766 = vunpack.c.h.b16 %v1659
        %v1767 = vunpack.c.l.b16 %v1660
        %v1768 = vunpack.c.h.b16 %v1660
        %v1769 = vunpack.c.l.b16 %v1661
        %v1770 = vunpack.c.h.b16 %v1661
        %v1771 = vunpack.c.l.b16 %v1662
        %v1772 = vunpack.c.h.b16 %v1662
        %v1773 = vunpack.c.l.b16 %v1663
        %v1774 = vunpack.c.h.b16 %v1663
        %v1775 = vunpack.c.l.b16 %v1664
        %v1776 = vunpack.c.h.b16 %v1664
        %v1777 = vunpack.c.l.b16 %v1665
        %v1778 = vunpack.c.h.b16 %v1665
        %v1779 = vunpack.c.l.b16 %v1666
        %v1780 = vunpack.c.h.b16 %v1666
        %v1781 = vunpack.c.l.b16 %v1667
        %v1782 = vunpack.c.h.b16 %v1667
        %v1783 = vunpack.c.l.b16 %v1668
        %v1784 = vunpack.c.h.b16 %v1668
        %v1785 = vunpack.c.l.b16 %v1669
        %v1786 = vunpack.c.h.b16 %v1669
        %v1787 = vunpack.c.l.b16 %v1670
        %v1788 = vunpack.c.h.b16 %v1670
        %v1789 = vpack.c.b16 %v1729, %v1725
        %v1790 = vpack.c.b16 %v1730, %v1726
        %v1791 = vpack.c.b16 %v1731, %v1727
        %v1792 = vpack.c.b16 %v1732, %v1728
        %v1793 = vpack.c.b16 %v1737, %v1733
        %v1794 = vpack.c.b16 %v1738, %v1734
        %v1795 = vpack.c.b16 %v1739, %v1735
        %v1796 = vpack.c.b16 %v1740, %v1736
        %v1797 = vpack.c.b16 %v1745, %v1741
        %v1798 = vpack.c.b16 %v1746, %v1742
        %v1799 = vpack.c.b16 %v1747, %v1743
        %v1800 = vpack.c.b16 %v1748, %v1744
        %v1801 = vpack.c.b16 %v1753, %v1749
        %v1802 = vpack.c.b16 %v1754, %v1750
        %v1803 = vpack.c.b16 %v1755, %v1751
        %v1804 = vpack.c.b16 %v1756, %v1752
        %v1805 = vpack.c.b16 %v1761, %v1757
        %v1806 = vpack.c.b16 %v1762, %v1758
        %v1807 = vpack.c.b16 %v1763, %v1759
        %v1808 = vpack.c.b16 %v1764, %v1760
        %v1809 = vpack.c.b16 %v1769, %v1765
        %v1810 = vpack.c.b16 %v1770, %v1766
        %v1811 = vpack.c.b16 %v1771, %v1767
        %v1812 = vpack.c.b16 %v1772, %v1768
        %v1813 = vpack.c.b16 %v1777, %v1773
        %v1814 = vpack.c.b16 %v1778, %v1774
        %v1815 = vpack.c.b16 %v1779, %v1775
        %v1816 = vpack.c.b16 %v1780, %v1776
        %v1817 = vpack.c.b16 %v1785, %v1781
        %v1818 = vpack.c.b16 %v1786, %v1782
        %v1819 = vpack.c.b16 %v1787, %v1783
        %v1820 = vpack.c.b16 %v1788, %v1784
        %1853 = vmatprep.subr.bf16.mxu0 %v1790
        %1854 = vmatpush1.bf16.msra.mxu0 %v1789
        %1855 = vmatprep.subr.bf16.mxu0 %v1794
        %1856 = vmatpush1.bf16.msra.mxu0 %v1793
        %1857 = vmatprep.subr.bf16.mxu0 %v1798
        %1858 = vmatpush1.bf16.msra.mxu0 %v1797
        %1859 = vmatprep.subr.bf16.mxu0 %v1802
        %1860 = vmatpush1.bf16.msra.mxu0 %v1801
        %1861 = vmatprep.subr.bf16.mxu0 %v1806
        %1862 = vmatpush1.bf16.msra.mxu0 %v1805
        %1863 = vmatprep.subr.bf16.mxu0 %v1810
        %1864 = vmatpush1.bf16.msra.mxu0 %v1809
        %1865 = vmatprep.subr.bf16.mxu0 %v1814
        %1866 = vmatpush1.bf16.msra.mxu0 %v1813
        %1867 = vmatprep.subr.bf16.mxu0 %v1818
        %1868 = vmatpush1.bf16.msra.mxu0 %v1817
        %1869 = vmatprep.subr.bf16.mxu0 0
        %1870 = vmatpush1.bf16.msra.mxu0 0
        %1871 = vmatprep.subr.bf16.mxu0 0
        %1872 = vmatpush1.bf16.msra.mxu0 0
        %1873 = vmatprep.subr.bf16.mxu0 0
        %1874 = vmatpush1.bf16.msra.mxu0 0
        %1875 = vmatprep.subr.bf16.mxu0 0
        %1876 = vmatpush1.bf16.msra.mxu0 0
        %1877 = vmatprep.subr.bf16.mxu0 0
        %1878 = vmatpush1.bf16.msra.mxu0 0
        %1879 = vmatprep.subr.bf16.mxu0 0
        %1880 = vmatpush1.bf16.msra.mxu0 0
        %1881 = vmatprep.subr.bf16.mxu0 0
        %1882 = vmatpush1.bf16.msra.mxu0 0
        %1883 = vmatprep.subr.bf16.mxu0 0
        %1884 = vmatpush1.bf16.msra.mxu0 0
        %1885 = vmatprep.mubr.bf16.mxu0 0
        %1886 = vmatmul.mubr.bf16.gmra.mrb[0].mxu0 %v1638
        %v1887 = vpop.f32.mrb[0].mxu0
        %v1888 = vadd.f32 %v1676, %v1887
        %v1889 = vpop.f32.mrb[0].mxu0
        %v1890 = vadd.f32 %v1680, %v1889
        %v1891 = vpop.f32.mrb[0].mxu0
        %v1892 = vpop.f32.mrb[0].mxu0
        %1893 = vdwg.mxu0
        %1894 = vmatprep.subr.bf16.mxu0 %v1792
        %1895 = vmatpush1.bf16.msra.mxu0 %v1791
        %1896 = vmatprep.subr.bf16.mxu0 %v1796
        %1897 = vmatpush1.bf16.msra.mxu0 %v1795
        %1898 = vmatprep.subr.bf16.mxu0 %v1800
        %1899 = vmatpush1.bf16.msra.mxu0 %v1799
        %1900 = vmatprep.subr.bf16.mxu0 %v1804
        %1901 = vmatpush1.bf16.msra.mxu0 %v1803
        %1902 = vmatprep.subr.bf16.mxu0 %v1808
        %1903 = vmatpush1.bf16.msra.mxu0 %v1807
        %1904 = vmatprep.subr.bf16.mxu0 %v1812
        %1905 = vmatpush1.bf16.msra.mxu0 %v1811
        %1906 = vmatprep.subr.bf16.mxu0 %v1816
        %1907 = vmatpush1.bf16.msra.mxu0 %v1815
        %1908 = vmatprep.subr.bf16.mxu0 %v1820
        %1909 = vmatpush1.bf16.msra.mxu0 %v1819
        %1910 = vmatprep.subr.bf16.mxu0 0
        %1911 = vmatpush1.bf16.msra.mxu0 0
        %1912 = vmatprep.subr.bf16.mxu0 0
        %1913 = vmatpush1.bf16.msra.mxu0 0
        %1914 = vmatprep.subr.bf16.mxu0 0
        %1915 = vmatpush1.bf16.msra.mxu0 0
        %1916 = vmatprep.subr.bf16.mxu0 0
        %1917 = vmatpush1.bf16.msra.mxu0 0
        %1918 = vmatprep.subr.bf16.mxu0 0
        %1919 = vmatpush1.bf16.msra.mxu0 0
        %1920 = vmatprep.subr.bf16.mxu0 0
        %1921 = vmatpush1.bf16.msra.mxu0 0
        %1922 = vmatprep.subr.bf16.mxu0 0
        %1923 = vmatpush1.bf16.msra.mxu0 0
        %1924 = vmatprep.subr.bf16.mxu0 0
        %1925 = vmatpush1.bf16.msra.mxu0 0
        %1926 = vmatprep.mubr.bf16.mxu0 0
        %1927 = vmatmul.mubr.bf16.gmra.mrb[0].mxu0 %v1638
        %v1928 = vpop.f32.mrb[0].mxu0
        %v1929 = vadd.f32 %v1684, %v1928
        %v1930 = vpop.f32.mrb[0].mxu0
        %v1931 = vadd.f32 %v1688, %v1930
        %v1932 = vpop.f32.mrb[0].mxu0
        %v1933 = vpop.f32.mrb[0].mxu0
        %1934 = vdwg.mxu0
        %v1935 = vmul.f32 %v1888, 0.5
        %v1936 = vmul.f32 %v1890, 0.5
        %v1937 = vmul.f32 %v1929, 0.5
        %v1938 = vmul.f32 %v1931, 0.5
        %v1939 = vmul.f32 %v1888, %v1888
        %v1940 = vmul.f32 %v1890, %v1890
        %v1941 = vmul.f32 %v1929, %v1929
        %v1942 = vmul.f32 %v1931, %v1931
        %v1943 = vmul.f32 %v1888, %v1939
        %v1944 = vmul.f32 %v1890, %v1940
        %v1945 = vmul.f32 %v1929, %v1941
        %v1946 = vmul.f32 %v1931, %v1942
        %v1947 = vmul.f32 %v1943, 0.044715
        %v1948 = vmul.f32 %v1944, 0.044715
        %v1949 = vmul.f32 %v1945, 0.044715
        %v1950 = vmul.f32 %v1946, 0.044715
        %v1951 = vadd.f32 %v1888, %v1947
        %v1952 = vadd.f32 %v1890, %v1948
        %v1953 = vadd.f32 %v1929, %v1949
        %v1954 = vadd.f32 %v1931, %v1950
        %v1955 = vmul.f32 %v1951, 0.7978846
        %v1956 = vmul.f32 %v1952, 0.7978846
        %v1957 = vmul.f32 %v1953, 0.7978846
        %v1958 = vmul.f32 %v1954, 0.7978846
        %v1959 = vtanh.pop %v1955
        %v1960 = vtanh.pop %v1956
        %v1961 = vtanh.pop %v1957
        %v1962 = vtanh.pop %v1958
        %v1963 = vadd.f32 %v1959, 1.0
        %v1964 = vadd.f32 %v1960, 1.0
        %v1965 = vadd.f32 %v1961, 1.0
        %v1966 = vadd.f32 %v1962, 1.0
        %v1967 = vmul.f32 %v1935, %v1963
        %v1968 = vmul.f32 %v1936, %v1964
        %v1969 = vmul.f32 %v1937, %v1965
        %v1970 = vmul.f32 %v1938, %v1966
        %v1971 = vpack.c.bf16 %v1967, %v1967
        %v1972 = vpack.c.bf16 %v1968, %v1968
        %v1973 = vpack.c.bf16 %v1969, %v1969
        %v1974 = vpack.c.bf16 %v1970, %v1970
        %v1975 = vld [vmem:[%s723] sm:$0xf]
        %v1976 = vld [vmem:[%s723 + $0x4] sm:$0xf]
        %v1977 = vld [vmem:[%s723 + $0x8] sm:$0xf]
        %v1978 = vld [vmem:[%s723 + $0xc] sm:$0xf]
        %v1979 = vld [vmem:[%s723 + $0x10] sm:$0xf]
        %v1980 = vld [vmem:[%s723 + $0x14] sm:$0xf]
        %v1981 = vld [vmem:[%s723 + $0x18] sm:$0xf]
        %v1982 = vld [vmem:[%s723 + $0x1c] sm:$0xf]
        %v1983 = vld [vmem:[%s723 + $0x20] sm:$0xf]
        %v1984 = vld [vmem:[%s723 + $0x24] sm:$0xf]
        %v1985 = vld [vmem:[%s723 + $0x28] sm:$0xf]
        %v1986 = vld [vmem:[%s723 + $0x2c] sm:$0xf]
        %v1987 = vld [vmem:[%s723 + $0x30] sm:$0xf]
        %v1988 = vld [vmem:[%s723 + $0x34] sm:$0xf]
        %v1989 = vld [vmem:[%s723 + $0x38] sm:$0xf]
        %v1990 = vld [vmem:[%s723 + $0x3c] sm:$0xf]
        %v1991 = vld [vmem:[%s723 + $0x40] sm:$0xf]
        %v1992 = vld [vmem:[%s723 + $0x44] sm:$0xf]
        %v1993 = vld [vmem:[%s723 + $0x48] sm:$0xf]
        %v1994 = vld [vmem:[%s723 + $0x4c] sm:$0xf]
        %v1995 = vld [vmem:[%s723 + $0x50] sm:$0xf]
        %v1996 = vld [vmem:[%s723 + $0x54] sm:$0xf]
        %v1997 = vld [vmem:[%s723 + $0x58] sm:$0xf]
        %v1998 = vld [vmem:[%s723 + $0x5c] sm:$0xf]
        %v1999 = vld [vmem:[%s723 + $0x60] sm:$0xf]
        %v2000 = vld [vmem:[%s723 + $0x64] sm:$0xf]
        %v2001 = vld [vmem:[%s723 + $0x68] sm:$0xf]
        %v2002 = vld [vmem:[%s723 + $0x6c] sm:$0xf]
        %v2003 = vld [vmem:[%s723 + $0x70] sm:$0xf]
        %v2004 = vld [vmem:[%s723 + $0x74] sm:$0xf]
        %v2005 = vld [vmem:[%s723 + $0x78] sm:$0xf]
        %v2006 = vld [vmem:[%s723 + $0x7c] sm:$0xf]
        %v2007 = vld [vmem:[%s723 + $0x80] sm:$0xf]
        %v2008 = vld [vmem:[%s723 + $0x84] sm:$0xf]
        %v2009 = vld [vmem:[%s723 + $0x88] sm:$0xf]
        %v2010 = vld [vmem:[%s723 + $0x8c] sm:$0xf]
        %v2011 = vld [vmem:[%s723 + $0x90] sm:$0xf]
        %v2012 = vld [vmem:[%s723 + $0x94] sm:$0xf]
        %v2013 = vld [vmem:[%s723 + $0x98] sm:$0xf]
        %v2014 = vld [vmem:[%s723 + $0x9c] sm:$0xf]
        %v2015 = vld [vmem:[%s723 + $0xa0] sm:$0xf]
        %v2016 = vld [vmem:[%s723 + $0xa4] sm:$0xf]
        %v2017 = vld [vmem:[%s723 + $0xa8] sm:$0xf]
        %v2018 = vld [vmem:[%s723 + $0xac] sm:$0xf]
        %v2019 = vld [vmem:[%s723 + $0xb0] sm:$0xf]
        %v2020 = vld [vmem:[%s723 + $0xb4] sm:$0xf]
        %v2021 = vld [vmem:[%s723 + $0xb8] sm:$0xf]
        %v2022 = vld [vmem:[%s723 + $0xbc] sm:$0xf]
        %v2023 = vld [vmem:[%s723 + $0xc0] sm:$0xf]
        %v2024 = vld [vmem:[%s723 + $0xc4] sm:$0xf]
        %v2025 = vld [vmem:[%s723 + $0xc8] sm:$0xf]
        %v2026 = vld [vmem:[%s723 + $0xcc] sm:$0xf]
        %v2027 = vld [vmem:[%s723 + $0xd0] sm:$0xf]
        %v2028 = vld [vmem:[%s723 + $0xd4] sm:$0xf]
        %v2029 = vld [vmem:[%s723 + $0xd8] sm:$0xf]
        %v2030 = vld [vmem:[%s723 + $0xdc] sm:$0xf]
        %v2031 = vld [vmem:[%s723 + $0xe0] sm:$0xf]
        %v2032 = vld [vmem:[%s723 + $0xe4] sm:$0xf]
        %v2033 = vld [vmem:[%s723 + $0xe8] sm:$0xf]
        %v2034 = vld [vmem:[%s723 + $0xec] sm:$0xf]
        %v2035 = vld [vmem:[%s723 + $0xf0] sm:$0xf]
        %v2036 = vld [vmem:[%s723 + $0xf4] sm:$0xf]
        %v2037 = vld [vmem:[%s723 + $0xf8] sm:$0xf]
        %v2038 = vld [vmem:[%s723 + $0xfc] sm:$0xf]
        %v2039 = vld [vmem:[%s726] sm:$0x1]
        %v2041 = vlaneseq
        %v2042 = vshrl.u32 %v2041, 7
        %v2043 = vsub.s32 0, %v2042
        %v2044 = vrot.slane %v2039, %v2043
        %v2110 = vunpack.c.l.b16 %v1975
        %v2111 = vunpack.c.l.b16 %v1976
        %v2112 = vunpack.c.l.b16 %v1977
        %v2113 = vunpack.c.l.b16 %v1978
        %v2114 = vunpack.c.l.b16 %v1979
        %v2115 = vunpack.c.l.b16 %v1980
        %v2116 = vunpack.c.l.b16 %v1981
        %v2117 = vunpack.c.l.b16 %v1982
        %v2118 = vunpack.c.l.b16 %v1983
        %v2119 = vunpack.c.l.b16 %v1984
        %v2120 = vunpack.c.l.b16 %v1985
        %v2121 = vunpack.c.l.b16 %v1986
        %v2122 = vunpack.c.l.b16 %v1987
        %v2123 = vunpack.c.l.b16 %v1988
        %v2124 = vunpack.c.l.b16 %v1989
        %v2125 = vunpack.c.l.b16 %v1990
        %v2126 = vunpack.c.l.b16 %v1991
        %v2127 = vunpack.c.l.b16 %v1992
        %v2128 = vunpack.c.l.b16 %v1993
        %v2129 = vunpack.c.l.b16 %v1994
        %v2130 = vunpack.c.l.b16 %v1995
        %v2131 = vunpack.c.l.b16 %v1996
        %v2132 = vunpack.c.l.b16 %v1997
        %v2133 = vunpack.c.l.b16 %v1998
        %v2134 = vunpack.c.l.b16 %v1999
        %v2135 = vunpack.c.l.b16 %v2000
        %v2136 = vunpack.c.l.b16 %v2001
        %v2137 = vunpack.c.l.b16 %v2002
        %v2138 = vunpack.c.l.b16 %v2003
        %v2139 = vunpack.c.l.b16 %v2004
        %v2140 = vunpack.c.l.b16 %v2005
        %v2141 = vunpack.c.l.b16 %v2006
        %v2142 = vunpack.c.l.b16 %v2007
        %v2143 = vunpack.c.l.b16 %v2008
        %v2144 = vunpack.c.l.b16 %v2009
        %v2145 = vunpack.c.l.b16 %v2010
        %v2146 = vunpack.c.l.b16 %v2011
        %v2147 = vunpack.c.l.b16 %v2012
        %v2148 = vunpack.c.l.b16 %v2013
        %v2149 = vunpack.c.l.b16 %v2014
        %v2150 = vunpack.c.l.b16 %v2015
        %v2151 = vunpack.c.l.b16 %v2016
        %v2152 = vunpack.c.l.b16 %v2017
        %v2153 = vunpack.c.l.b16 %v2018
        %v2154 = vunpack.c.l.b16 %v2019
        %v2155 = vunpack.c.l.b16 %v2020
        %v2156 = vunpack.c.l.b16 %v2021
        %v2157 = vunpack.c.l.b16 %v2022
        %v2158 = vunpack.c.l.b16 %v2023
        %v2159 = vunpack.c.l.b16 %v2024
        %v2160 = vunpack.c.l.b16 %v2025
        %v2161 = vunpack.c.l.b16 %v2026
        %v2162 = vunpack.c.l.b16 %v2027
        %v2163 = vunpack.c.l.b16 %v2028
        %v2164 = vunpack.c.l.b16 %v2029
        %v2165 = vunpack.c.l.b16 %v2030
        %v2166 = vunpack.c.l.b16 %v2031
        %v2167 = vunpack.c.l.b16 %v2032
        %v2168 = vunpack.c.l.b16 %v2033
        %v2169 = vunpack.c.l.b16 %v2034
        %v2170 = vunpack.c.l.b16 %v2035
        %v2171 = vunpack.c.l.b16 %v2036
        %v2172 = vunpack.c.l.b16 %v2037
        %v2173 = vunpack.c.l.b16 %v2038
        %v2174 = vpack.c.b16 %v2111, %v2110
        %v2175 = vpack.c.b16 %v2113, %v2112
        %v2176 = vpack.c.b16 %v2115, %v2114
        %v2177 = vpack.c.b16 %v2117, %v2116
        %v2178 = vpack.c.b16 %v2119, %v2118
        %v2179 = vpack.c.b16 %v2121, %v2120
        %v2180 = vpack.c.b16 %v2123, %v2122
        %v2181 = vpack.c.b16 %v2125, %v2124
        %v2182 = vpack.c.b16 %v2127, %v2126
        %v2183 = vpack.c.b16 %v2129, %v2128
        %v2184 = vpack.c.b16 %v2131, %v2130
        %v2185 = vpack.c.b16 %v2133, %v2132
        %v2186 = vpack.c.b16 %v2135, %v2134
        %v2187 = vpack.c.b16 %v2137, %v2136
        %v2188 = vpack.c.b16 %v2139, %v2138
        %v2189 = vpack.c.b16 %v2141, %v2140
        %v2190 = vpack.c.b16 %v2143, %v2142
        %v2191 = vpack.c.b16 %v2145, %v2144
        %v2192 = vpack.c.b16 %v2147, %v2146
        %v2193 = vpack.c.b16 %v2149, %v2148
        %v2194 = vpack.c.b16 %v2151, %v2150
        %v2195 = vpack.c.b16 %v2153, %v2152
        %v2196 = vpack.c.b16 %v2155, %v2154
        %v2197 = vpack.c.b16 %v2157, %v2156
        %v2198 = vpack.c.b16 %v2159, %v2158
        %v2199 = vpack.c.b16 %v2161, %v2160
        %v2200 = vpack.c.b16 %v2163, %v2162
        %v2201 = vpack.c.b16 %v2165, %v2164
        %v2202 = vpack.c.b16 %v2167, %v2166
        %v2203 = vpack.c.b16 %v2169, %v2168
        %v2204 = vpack.c.b16 %v2171, %v2170
        %v2205 = vpack.c.b16 %v2173, %v2172
        %2238 = vmatprep.subr.bf16.mxu0 0
        %2239 = vmatpush1.bf16.msra.mxu0 %v2174
        %2240 = vmatprep.subr.bf16.mxu0 0
        %2241 = vmatpush1.bf16.msra.mxu0 %v2175
        %2242 = vmatprep.subr.bf16.mxu0 0
        %2243 = vmatpush1.bf16.msra.mxu0 %v2176
        %2244 = vmatprep.subr.bf16.mxu0 0
        %2245 = vmatpush1.bf16.msra.mxu0 %v2177
        %2246 = vmatprep.subr.bf16.mxu0 0
        %2247 = vmatpush1.bf16.msra.mxu0 %v2178
        %2248 = vmatprep.subr.bf16.mxu0 0
        %2249 = vmatpush1.bf16.msra.mxu0 %v2179
        %2250 = vmatprep.subr.bf16.mxu0 0
        %2251 = vmatpush1.bf16.msra.mxu0 %v2180
        %2252 = vmatprep.subr.bf16.mxu0 0
        %2253 = vmatpush1.bf16.msra.mxu0 %v2181
        %2254 = vmatprep.subr.bf16.mxu0 0
        %2255 = vmatpush1.bf16.msra.mxu0 %v2182
        %2256 = vmatprep.subr.bf16.mxu0 0
        %2257 = vmatpush1.bf16.msra.mxu0 %v2183
        %2258 = vmatprep.subr.bf16.mxu0 0
        %2259 = vmatpush1.bf16.msra.mxu0 %v2184
        %2260 = vmatprep.subr.bf16.mxu0 0
        %2261 = vmatpush1.bf16.msra.mxu0 %v2185
        %2262 = vmatprep.subr.bf16.mxu0 0
        %2263 = vmatpush1.bf16.msra.mxu0 %v2186
        %2264 = vmatprep.subr.bf16.mxu0 0
        %2265 = vmatpush1.bf16.msra.mxu0 %v2187
        %2266 = vmatprep.subr.bf16.mxu0 0
        %2267 = vmatpush1.bf16.msra.mxu0 %v2188
        %2268 = vmatprep.subr.bf16.mxu0 0
        %2269 = vmatpush1.bf16.msra.mxu0 %v2189
        %2270 = vmatprep.mubr.bf16.mxu0 %v1972
        %2271 = vmatmul.mubr.bf16.gmra.mrb[0].mxu0 %v1971
        %v2272 = vpop.f32.mrb[0].mxu0
        %v2273 = vadd.f32 %v2044, %v2272
        %v2274 = vpop.f32.mrb[0].mxu0
        %v2275 = vpop.f32.mrb[0].mxu0
        %v2276 = vpop.f32.mrb[0].mxu0
        %2277 = vdwg.mxu0
        %2278 = vmatprep.subr.bf16.mxu0 0
        %2279 = vmatpush1.bf16.msra.mxu0 %v2190
        %2280 = vmatprep.subr.bf16.mxu0 0
        %2281 = vmatpush1.bf16.msra.mxu0 %v2191
        %2282 = vmatprep.subr.bf16.mxu0 0
        %2283 = vmatpush1.bf16.msra.mxu0 %v2192
        %2284 = vmatprep.subr.bf16.mxu0 0
        %2285 = vmatpush1.bf16.msra.mxu0 %v2193
        %2286 = vmatprep.subr.bf16.mxu0 0
        %2287 = vmatpush1.bf16.msra.mxu0 %v2194
        %2288 = vmatprep.subr.bf16.mxu0 0
        %2289 = vmatpush1.bf16.msra.mxu0 %v2195
        %2290 = vmatprep.subr.bf16.mxu0 0
        %2291 = vmatpush1.bf16.msra.mxu0 %v2196
        %2292 = vmatprep.subr.bf16.mxu0 0
        %2293 = vmatpush1.bf16.msra.mxu0 %v2197
        %2294 = vmatprep.subr.bf16.mxu0 0
        %2295 = vmatpush1.bf16.msra.mxu0 %v2198
        %2296 = vmatprep.subr.bf16.mxu0 0
        %2297 = vmatpush1.bf16.msra.mxu0 %v2199
        %2298 = vmatprep.subr.bf16.mxu0 0
        %2299 = vmatpush1.bf16.msra.mxu0 %v2200
        %2300 = vmatprep.subr.bf16.mxu0 0
        %2301 = vmatpush1.bf16.msra.mxu0 %v2201
        %2302 = vmatprep.subr.bf16.mxu0 0
        %2303 = vmatpush1.bf16.msra.mxu0 %v2202
        %2304 = vmatprep.subr.bf16.mxu0 0
        %2305 = vmatpush1.bf16.msra.mxu0 %v2203
        %2306 = vmatprep.subr.bf16.mxu0 0
        %2307 = vmatpush1.bf16.msra.mxu0 %v2204
        %2308 = vmatprep.subr.bf16.mxu0 0
        %2309 = vmatpush1.bf16.msra.mxu0 %v2205
        %2310 = vmatprep.mubr.bf16.mxu0 %v1974
        %2311 = vmatmul.mubr.bf16.gmra.mrb[0].mxu0 %v1973
        %v2312 = vpop.f32.mrb[0].mxu0
        %v2313 = vadd.f32 %v2273, %v2312
        %v2314 = vpop.f32.mrb[0].mxu0
        %v2315 = vpop.f32.mrb[0].mxu0
        %v2316 = vpop.f32.mrb[0].mxu0
        %2317 = vdwg.mxu0
        %v2318 = vadd.f32 %v1610, %v2313
        %2319 = vst [vmem:[#allocation2] sm:$0xff] %v2318
        %p2320 = scmp.eq.s32.totalorder %s35, 1
        // Predicated region
        $region89: #{pico_gpt_forward.1} parent=83 // pred_check
          %p2321 = pneg %p2320
        $region90: #{pico_gpt_forward.1} parent=83 // pred_check_branch
          %2323 = sbr.rel (%p2321) target = $region92
        $region91: #{pico_gpt_forward.1} parent=83 // pred_region
          %v2324 = vld [vmem:[%s14] sm:$0x1]
          %v2325 = vld [vmem:[%s15] sm:$0x1]
          %2326 = vadd.xlane.f32.xlu0 %v2318
          %v2327 = vpop.xlane.xlu0 %2326
          %v2328 = vmul.f32 %v2327, %v741
          %v2329 = vsub.f32 %v2318, %v2328
          %v2330 = vmul.f32 %v2329, %v2329
          %2331 = vadd.xlane.f32.xlu0 %v2330
          %v2332 = vpop.xlane.xlu0 %2331
          %v2333 = vmul.f32 %v2332, %v741
          %v2334 = vadd.f32 %v2333, 1e-05
          %v2335 = vrsqrt.pop %v2334
          %v2336 = vmul.f32 %v2329, %v2335
          %v2338 = vlaneseq
          %v2339 = vshrl.u32 %v2338, 7
          %v2340 = vsub.s32 0, %v2339
          %v2341 = vrot.slane %v2324, %v2340
          %v2343 = vmul.f32 %v2336, %v2341
          %v2345 = vlaneseq
          %v2346 = vshrl.u32 %v2345, 7
          %v2347 = vsub.s32 0, %v2346
          %v2348 = vrot.slane %v2325, %v2347
          %v2350 = vadd.f32 %v2343, %v2348
          %2351 = vst [vmem:[%s676] sm:$0xff] %v2350
        $region92: #{pico_gpt_forward.1} parent=83 // pred_fallthru
          _
        %s2352 = sand.u32 %s451, 1
        %s2353 = scalar_lea.sflag [#allocation4], %s2352
        %s2354 = sand.u32 %s451, 1
        %s2355 = smul.addr %s2354, 8
        %s2356 = scalar_lea.vmem [#allocation3], %s2355
        // Predicated region
        $region93: #{pico_gpt_forward.1} parent=83 // pred_check
          %p2357 = pneg %p461
        $region94: #{pico_gpt_forward.1} parent=83 // pred_check_branch
          %2359 = sbr.rel (%p2357) target = $region96
        $region95: #{pico_gpt_forward.1} parent=83 // pred_region
          %s2361 = ssub.s32 128, 128
          %2362 = vsyncadd %s2353, %s2361
          %s2363 = smul.addr %s34, 128
          %s2364 = scalar_lea.hbm %s16, %s2363
          %s2366 = sshll.u32 %s2356, 4
          %s2367 = int_to_ptr.vmem [resolvable:$true] %s2366
          %2369 = dma.vmem_to_hbm [thread:$0]  %s2367, 128, %s2364, %s2353
        $region96: #{pico_gpt_forward.1} parent=83 // pred_fallthru
          _
      $region84: #{pico_gpt_forward.1} parent=5 // pred_fallthru
        _
      %p2370 = scmp.le.s32.totalorder 2, %s25
      // Predicated region
      $region97: #{pico_gpt_forward.1} parent=5 // pred_check
        %p2371 = pneg %p2370
      $region98: #{pico_gpt_forward.1} parent=5 // pred_check_branch
        %2373 = sbr.rel (%p2371) target = $region100
      $region99: #{pico_gpt_forward.1} parent=5 // pred_region
        %s2374 = ssub.s32 %s25, 2
        // Predicated region
        $region101: #{pico_gpt_forward.1} parent=99 // pred_check
          %p2375 = pneg %p467
        $region102: #{pico_gpt_forward.1} parent=99 // pred_check_branch
          %2377 = sbr.rel (%p2375) target = $region104
        $region103: #{pico_gpt_forward.1} parent=99 // pred_region
          %s2378 = sand.u32 %s452, 1
          %s2379 = scalar_lea.sflag [#allocation4], %s2378
          %s2380 = sand.u32 %s452, 1
          %s2381 = smul.addr %s2380, 8
          %s2382 = scalar_lea.vmem [#allocation3], %s2381
          %2383 = dma.done %s2379, 128
        $region104: #{pico_gpt_forward.1} parent=99 // pred_fallthru
          _
      $region100: #{pico_gpt_forward.1} parent=5 // pred_fallthru
        _
    $region6: #{pico_gpt_forward.1} parent=1 // loop_footer
      %s29 = sadd.s32 1, %s25
    $region7: #{pico_gpt_forward.1} parent=1 // loop_footer_branch
      %24 = sbr.rel target = $region3
    $region8: #{pico_gpt_forward.1} parent=1 // loop_exit
      _
    %2384 = vsyncpa [#allocation4], 1
    %s2385 = scalar_lea.sflag [#allocation4], 1
    %2386 = vsyncpa %s2385, 1

</llo_original>
